<compile_context>
chip_gen: v6e
topology: v6e:2x2x1
jax: 0.10.0
libtpu: 0.0.40
codegen_flags: <defaults>
</compile_context>

<pallas_src>
import functools
import math

import jax
import jax.numpy as jnp
import numpy as np
from jax.experimental import pallas as pl
from jax.experimental.pallas import tpu as pltpu


def _upsample_nearest_kernel(x_ref, o_ref, *, scale: int, w: int, pack: int):
    """x_ref: (TB, pack*w) packed input rows; o_ref: (TB, pack*scale*scale*w).

    For each packed chunk j (one original input row) the widened row
    wide_j[l] = x_j[l // scale] is written into `scale` consecutive
    (scale*w)-wide slots of the output row, so the wrapper's contiguous
    reshape yields nearest-neighbour upsampling in both H and W.
    """
    s = scale
    sw = s * w
    x = x_ref[...]                                    # (TB, pack*w)
    tb = x.shape[0]
    for j in range(pack):
        xj = x[:, j * w:(j + 1) * w]                  # (TB, w), static slice
        # W-direction nearest repeat (lane interleave) on input-sized data:
        #   wide_j[:, l] = xj[:, l // s]
        # TODO(synk): audit this broadcast+reshape with pl.lower_as_mlir; if
        # Mosaic materializes the (TB, w, s) intermediate, switch to a one-hot
        # repeat matrix on the idle MXU (needs HIGHEST precision for exactness).
        wide_j = jnp.broadcast_to(xj[:, :, None], (tb, w, s)).reshape(tb, sw)
        # H-direction duplication: sliced stores (no jnp.tile output temp).
        for k in range(s):
            off = (j * s + k) * sw
            o_ref[:, off:off + sw] = wide_j


def upsample_nearest(x: jax.Array, scale_factor: int = 2) -> jax.Array:
    """Equivalent of nn.Upsample(scale_factor=scale_factor, mode='nearest')(x)."""
    # TODO(synk): only mode='nearest' with an integer scale_factor is handled
    # (matches the reference usage); `size=`, non-integer scales and
    # bilinear/bicubic/align_corners modes are not translated.
    s = int(scale_factor)
    N, C, H, W = x.shape
    if s == 1:
        return x

    rows = N * C * H
    itemsize = x.dtype.itemsize

    # Row packing P: make the kernel blocks lane-dense (last dim a multiple of
    # 128) so loads/stores and the HBM writeback are unmasked full-width.
    P = 128 // math.gcd(128, W)                       # input width dense too
    if P > 32 or rows % P != 0:
        P = 128 // math.gcd(128, s * s * W)           # at least output dense
        if P > 32 or rows % P != 0:
            P = 1                                     # fallback: masked edges
    rows_p = rows // P
    in_row = P * W
    out_row = P * s * s * W

    xf = x.reshape(rows_p, in_row)                    # contiguous, free

    # Sublane packing per dtype: f32 -> 8, bf16/f16 -> 16, int8/fp8 -> 32.
    sub = max(8, 32 // itemsize)

    # ~4 MiB of output per grid step (double-buffered in+out plus the widen
    # temp stays inside every generation's scoped VMEM).
    # TODO(synk): bump to 8-12 MiB on v7x once the interleave relayout is
    # audited (per-step overhead vs VMEM-footprint trade-off).
    target_out_bytes = 4 * 1024 * 1024
    out_row_bytes = out_row * itemsize
    tb = max(1, target_out_bytes // out_row_bytes)
    if tb >= rows_p:
        tb = rows_p
        # v7x has 2 TensorCores: keep >= 2 grid steps on the "parallel" axis.
        if rows_p >= 2 * sub:
            tb = max(sub, ((rows_p // 2) // sub) * sub)
    else:
        tb = max(sub, (tb // sub) * sub)
    grid = (pl.cdiv(rows_p, tb),)

    # VMEM budget from the actual block footprint (double-buffered in + out,
    # per-chunk widen temp, slack), capped below physical VMEM on all gens.
    lane_pad = lambda n: max(n, 128)
    in_blk = tb * lane_pad(in_row) * itemsize
    out_blk = tb * lane_pad(out_row) * itemsize
    widen_tmp = tb * lane_pad(s * W) * itemsize
    vmem_limit = int(2 * (in_blk + out_blk) + 2 * widen_tmp + (8 << 20))
    vmem_limit = min(max(vmem_limit, 16 << 20), 64 << 20)

    bytes_accessed = rows * W * itemsize * (1 + s * s)

    out = pl.pallas_call(
        functools.partial(_upsample_nearest_kernel, scale=s, w=W, pack=P),
        out_shape=jax.ShapeDtypeStruct((rows_p, out_row), x.dtype),
        grid=grid,
        in_specs=[pl.BlockSpec((tb, in_row), lambda i: (i, 0))],
        out_specs=pl.BlockSpec((tb, out_row), lambda i: (i, 0)),
        compiler_params=pltpu.CompilerParams(
            dimension_semantics=("parallel",),
            vmem_limit_bytes=vmem_limit,
        ),
        cost_estimate=pl.CostEstimate(
            flops=0, transcendentals=0, bytes_accessed=int(bytes_accessed)),
    )(xf)

    # (rows//P, P*s*s*W) -> (N, C, H*s, W*s): contiguous reshape, free in HBM.
    return out.reshape(N, C, H * s, W * s)


if __name__ == "__main__":
    key = jax.random.PRNGKey(0)
    N, C, H, W = 2, 4, 16, 16
    scale = 2

    x = jax.random.normal(key, (N, C, H, W), dtype=jnp.float32)

    y = upsample_nearest(x, scale_factor=scale)
    y = jax.block_until_ready(y)

    # Reference: nearest-neighbor upsample (matches F.interpolate mode='nearest'
    # with integer scale_factor exactly).
    x_np = np.asarray(x)
    ref = np.repeat(np.repeat(x_np, scale, axis=2), scale, axis=3)

    assert y.shape == (N, C, H * scale, W * scale), y.shape
    np.testing.assert_allclose(np.asarray(y), ref, rtol=0, atol=0)

    print("KERNEL_OK")
</pallas_src>

<mosaic_0001>
module attributes {stable_mosaic.version = 11 : i64} {
  func.func @_upsample_nearest_kernel(%arg0: i32, %arg1: memref<8x128xf32, #tpu.memory_space<vmem>>, %arg2: memref<8x512xf32, #tpu.memory_space<vmem>>) attributes {dimension_semantics = [#tpu.dimension_semantics<parallel>], iteration_bounds = array<i64: 2>, scalar_prefetch = 0 : i64, scratch_operands = 0 : i64, tpu.core_type = #tpu.core_type<tc>, window_params = [{transform_indices = @transform_0, window_bounds = array<i64: 8, 128>}, {transform_indices = @transform_1, window_bounds = array<i64: 8, 512>}]} {
    %c0 = arith.constant 0 : index
    %c0_0 = arith.constant 0 : index
    %0 = vector.load %arg1[%c0, %c0_0] : memref<8x128xf32, #tpu.memory_space<vmem>>, vector<8x128xf32>
    %1 = vector.extract_strided_slice %0 {offsets = [0, 0], sizes = [8, 16], strides = [1, 1]} : vector<8x128xf32> to vector<8x16xf32>
    %2 = vector.shape_cast %1 : vector<8x16xf32> to vector<8x16x1xf32>
    %3 = vector.shape_cast %2 : vector<8x16x1xf32> to vector<8x16x1xf32>
    %4 = vector.broadcast %3 : vector<8x16x1xf32> to vector<8x16x2xf32>
    %5 = vector.shape_cast %4 : vector<8x16x2xf32> to vector<8x32xf32>
    %c0_1 = arith.constant 0 : index
    %c0_2 = arith.constant 0 : index
    %6 = vector.load %arg2[%c0_1, %c0_2] : memref<8x512xf32, #tpu.memory_space<vmem>>, vector<8x32xf32>
    tpu.vector_store %arg2[%c0_1, %c0_2], %5 {strides = array<i32>} : memref<8x512xf32, #tpu.memory_space<vmem>>, vector<8x32xf32>,
    %c0_3 = arith.constant 0 : index
    %c32 = arith.constant 32 : index
    %7 = vector.load %arg2[%c0_3, %c32] : memref<8x512xf32, #tpu.memory_space<vmem>>, vector<8x32xf32>
    tpu.vector_store %arg2[%c0_3, %c32], %5 {strides = array<i32>} : memref<8x512xf32, #tpu.memory_space<vmem>>, vector<8x32xf32>,
    %8 = vector.extract_strided_slice %0 {offsets = [0, 16], sizes = [8, 16], strides = [1, 1]} : vector<8x128xf32> to vector<8x16xf32>
    %9 = vector.shape_cast %8 : vector<8x16xf32> to vector<8x16x1xf32>
    %10 = vector.shape_cast %9 : vector<8x16x1xf32> to vector<8x16x1xf32>
    %11 = vector.broadcast %10 : vector<8x16x1xf32> to vector<8x16x2xf32>
    %12 = vector.shape_cast %11 : vector<8x16x2xf32> to vector<8x32xf32>
    %c0_4 = arith.constant 0 : index
    %c64 = arith.constant 64 : index
    %13 = vector.load %arg2[%c0_4, %c64] : memref<8x512xf32, #tpu.memory_space<vmem>>, vector<8x32xf32>
    tpu.vector_store %arg2[%c0_4, %c64], %12 {strides = array<i32>} : memref<8x512xf32, #tpu.memory_space<vmem>>, vector<8x32xf32>,
    %c0_5 = arith.constant 0 : index
    %c96 = arith.constant 96 : index
    %14 = vector.load %arg2[%c0_5, %c96] : memref<8x512xf32, #tpu.memory_space<vmem>>, vector<8x32xf32>
    tpu.vector_store %arg2[%c0_5, %c96], %12 {strides = array<i32>} : memref<8x512xf32, #tpu.memory_space<vmem>>, vector<8x32xf32>,
    %15 = vector.extract_strided_slice %0 {offsets = [0, 32], sizes = [8, 16], strides = [1, 1]} : vector<8x128xf32> to vector<8x16xf32>
    %16 = vector.shape_cast %15 : vector<8x16xf32> to vector<8x16x1xf32>
    %17 = vector.shape_cast %16 : vector<8x16x1xf32> to vector<8x16x1xf32>
    %18 = vector.broadcast %17 : vector<8x16x1xf32> to vector<8x16x2xf32>
    %19 = vector.shape_cast %18 : vector<8x16x2xf32> to vector<8x32xf32>
    %c0_6 = arith.constant 0 : index
    %c128 = arith.constant 128 : index
    %20 = vector.load %arg2[%c0_6, %c128] : memref<8x512xf32, #tpu.memory_space<vmem>>, vector<8x32xf32>
    tpu.vector_store %arg2[%c0_6, %c128], %19 {strides = array<i32>} : memref<8x512xf32, #tpu.memory_space<vmem>>, vector<8x32xf32>,
    %c0_7 = arith.constant 0 : index
    %c160 = arith.constant 160 : index
    %21 = vector.load %arg2[%c0_7, %c160] : memref<8x512xf32, #tpu.memory_space<vmem>>, vector<8x32xf32>
    tpu.vector_store %arg2[%c0_7, %c160], %19 {strides = array<i32>} : memref<8x512xf32, #tpu.memory_space<vmem>>, vector<8x32xf32>,
    %22 = vector.extract_strided_slice %0 {offsets = [0, 48], sizes = [8, 16], strides = [1, 1]} : vector<8x128xf32> to vector<8x16xf32>
    %23 = vector.shape_cast %22 : vector<8x16xf32> to vector<8x16x1xf32>
    %24 = vector.shape_cast %23 : vector<8x16x1xf32> to vector<8x16x1xf32>
    %25 = vector.broadcast %24 : vector<8x16x1xf32> to vector<8x16x2xf32>
    %26 = vector.shape_cast %25 : vector<8x16x2xf32> to vector<8x32xf32>
    %c0_8 = arith.constant 0 : index
    %c192 = arith.constant 192 : index
    %27 = vector.load %arg2[%c0_8, %c192] : memref<8x512xf32, #tpu.memory_space<vmem>>, vector<8x32xf32>
    tpu.vector_store %arg2[%c0_8, %c192], %26 {strides = array<i32>} : memref<8x512xf32, #tpu.memory_space<vmem>>, vector<8x32xf32>,
    %c0_9 = arith.constant 0 : index
    %c224 = arith.constant 224 : index
    %28 = vector.load %arg2[%c0_9, %c224] : memref<8x512xf32, #tpu.memory_space<vmem>>, vector<8x32xf32>
    tpu.vector_store %arg2[%c0_9, %c224], %26 {strides = array<i32>} : memref<8x512xf32, #tpu.memory_space<vmem>>, vector<8x32xf32>,
    %29 = vector.extract_strided_slice %0 {offsets = [0, 64], sizes = [8, 16], strides = [1, 1]} : vector<8x128xf32> to vector<8x16xf32>
    %30 = vector.shape_cast %29 : vector<8x16xf32> to vector<8x16x1xf32>
    %31 = vector.shape_cast %30 : vector<8x16x1xf32> to vector<8x16x1xf32>
    %32 = vector.broadcast %31 : vector<8x16x1xf32> to vector<8x16x2xf32>
    %33 = vector.shape_cast %32 : vector<8x16x2xf32> to vector<8x32xf32>
    %c0_10 = arith.constant 0 : index
    %c256 = arith.constant 256 : index
    %34 = vector.load %arg2[%c0_10, %c256] : memref<8x512xf32, #tpu.memory_space<vmem>>, vector<8x32xf32>
    tpu.vector_store %arg2[%c0_10, %c256], %33 {strides = array<i32>} : memref<8x512xf32, #tpu.memory_space<vmem>>, vector<8x32xf32>,
    %c0_11 = arith.constant 0 : index
    %c288 = arith.constant 288 : index
    %35 = vector.load %arg2[%c0_11, %c288] : memref<8x512xf32, #tpu.memory_space<vmem>>, vector<8x32xf32>
    tpu.vector_store %arg2[%c0_11, %c288], %33 {strides = array<i32>} : memref<8x512xf32, #tpu.memory_space<vmem>>, vector<8x32xf32>,
    %36 = vector.extract_strided_slice %0 {offsets = [0, 80], sizes = [8, 16], strides = [1, 1]} : vector<8x128xf32> to vector<8x16xf32>
    %37 = vector.shape_cast %36 : vector<8x16xf32> to vector<8x16x1xf32>
    %38 = vector.shape_cast %37 : vector<8x16x1xf32> to vector<8x16x1xf32>
    %39 = vector.broadcast %38 : vector<8x16x1xf32> to vector<8x16x2xf32>
    %40 = vector.shape_cast %39 : vector<8x16x2xf32> to vector<8x32xf32>
    %c0_12 = arith.constant 0 : index
    %c320 = arith.constant 320 : index
    %41 = vector.load %arg2[%c0_12, %c320] : memref<8x512xf32, #tpu.memory_space<vmem>>, vector<8x32xf32>
    tpu.vector_store %arg2[%c0_12, %c320], %40 {strides = array<i32>} : memref<8x512xf32, #tpu.memory_space<vmem>>, vector<8x32xf32>,
    %c0_13 = arith.constant 0 : index
    %c352 = arith.constant 352 : index
    %42 = vector.load %arg2[%c0_13, %c352] : memref<8x512xf32, #tpu.memory_space<vmem>>, vector<8x32xf32>
    tpu.vector_store %arg2[%c0_13, %c352], %40 {strides = array<i32>} : memref<8x512xf32, #tpu.memory_space<vmem>>, vector<8x32xf32>,
    %43 = vector.extract_strided_slice %0 {offsets = [0, 96], sizes = [8, 16], strides = [1, 1]} : vector<8x128xf32> to vector<8x16xf32>
    %44 = vector.shape_cast %43 : vector<8x16xf32> to vector<8x16x1xf32>
    %45 = vector.shape_cast %44 : vector<8x16x1xf32> to vector<8x16x1xf32>
    %46 = vector.broadcast %45 : vector<8x16x1xf32> to vector<8x16x2xf32>
    %47 = vector.shape_cast %46 : vector<8x16x2xf32> to vector<8x32xf32>
    %c0_14 = arith.constant 0 : index
    %c384 = arith.constant 384 : index
    %48 = vector.load %arg2[%c0_14, %c384] : memref<8x512xf32, #tpu.memory_space<vmem>>, vector<8x32xf32>
    tpu.vector_store %arg2[%c0_14, %c384], %47 {strides = array<i32>} : memref<8x512xf32, #tpu.memory_space<vmem>>, vector<8x32xf32>,
    %c0_15 = arith.constant 0 : index
    %c416 = arith.constant 416 : index
    %49 = vector.load %arg2[%c0_15, %c416] : memref<8x512xf32, #tpu.memory_space<vmem>>, vector<8x32xf32>
    tpu.vector_store %arg2[%c0_15, %c416], %47 {strides = array<i32>} : memref<8x512xf32, #tpu.memory_space<vmem>>, vector<8x32xf32>,
    %50 = vector.extract_strided_slice %0 {offsets = [0, 112], sizes = [8, 16], strides = [1, 1]} : vector<8x128xf32> to vector<8x16xf32>
    %51 = vector.shape_cast %50 : vector<8x16xf32> to vector<8x16x1xf32>
    %52 = vector.shape_cast %51 : vector<8x16x1xf32> to vector<8x16x1xf32>
    %53 = vector.broadcast %52 : vector<8x16x1xf32> to vector<8x16x2xf32>
    %54 = vector.shape_cast %53 : vector<8x16x2xf32> to vector<8x32xf32>
    %c0_16 = arith.constant 0 : index
    %c448 = arith.constant 448 : index
    %55 = vector.load %arg2[%c0_16, %c448] : memref<8x512xf32, #tpu.memory_space<vmem>>, vector<8x32xf32>
    tpu.vector_store %arg2[%c0_16, %c448], %54 {strides = array<i32>} : memref<8x512xf32, #tpu.memory_space<vmem>>, vector<8x32xf32>,
    %c0_17 = arith.constant 0 : index
    %c480 = arith.constant 480 : index
    %56 = vector.load %arg2[%c0_17, %c480] : memref<8x512xf32, #tpu.memory_space<vmem>>, vector<8x32xf32>
    tpu.vector_store %arg2[%c0_17, %c480], %54 {strides = array<i32>} : memref<8x512xf32, #tpu.memory_space<vmem>>, vector<8x32xf32>,
    return
  }
  func.func @transform_0(%arg0: i32) -> (i32, i32) {
    %c0_i32 = arith.constant 0 : i32
    %c0_i32_0 = arith.constant 0 : i32
    return %arg0, %c0_i32 : i32, i32
  }
  func.func @transform_1(%arg0: i32) -> (i32, i32) {
    %c0_i32 = arith.constant 0 : i32
    %c0_i32_0 = arith.constant 0 : i32
    return %arg0, %c0_i32 : i32, i32
  }
}

</mosaic_0001>

<llo_original>
// kernel: tpu_custom_call.1
$region0: #{tpu_custom_call.1}
  #allocation0 [shape = 'u32[]', space=smem, size = 0x4, offset = 0x4, fixed_abs, tag = 'smem constant byte address 0x4 - core index']
  #allocation1 [shape = 'u32[144,128]{1,0:T(1,128)}', space=vmem, size = 0x12000, scoped, tag = 'internal scratch']
  %s0 = inlined_call_operand.hbm [shape: f32[16,128], index: 0, kind: input, shape index: {}]
  %s1 = inlined_call_operand.hbm [shape: f32[16,512], index: 1, kind: output, shape index: {}]
  %s2 = sld [smem:[#allocation0]]
  $region41: #{tpu_custom_call.1} parent=0
    _
  %s4 = ssub.s32 1, %s2
  %s5 = scalar_select 0, %s4, %s2
  $region1: #{tpu_custom_call.1} parent=0
    #allocation2 [shape = 'u8[8192]{0}', space=vmem, size = 0x2000, scoped, tag = 'input window, operand 0']
    #allocation3 [shape = 's32[2]{0}', space=sflag, size = 0x8, scoped, tag = 'scoped memory for tpu_custom_call.1']
    #allocation4 [shape = 's32[2]{0}', space=sflag, size = 0x8, scoped, tag = 'scoped memory for tpu_custom_call.1']
    #allocation5 [shape = 'u8[32768]{0}', space=vmem, size = 0x8000, scoped, tag = 'output window, operand 0']
    %6 = vsyncpa [#allocation3], 0
    %s7 = scalar_lea.sflag [#allocation3], 1
    %8 = vsyncpa %s7, 0
    %9 = vsyncpa [#allocation4], 0
    %s10 = scalar_lea.sflag [#allocation4], 1
    %11 = vsyncpa %s10, 0
    loop: start=0, step=1, limit=4
    $region2: #{tpu_custom_call.1} parent=1 // loop_pre_header
      _
    $region3: #{tpu_custom_call.1} parent=1 // loop_header
      %s13 = sphi 0, %s17
      %p14 = scmp.ge.s32.totalorder %s13, 4
      %s23 = sphi 0, %s25
      %s26 = sphi 0, %s23
      %s27 = sphi 0, %s26
      %s43 = sphi 0, %s27
      %s49 = sphi 0, %s51
      %s52 = sphi 0, %s49
      %s53 = sphi 0, %s52
      %s69 = sphi 0, %s53
    $region4: #{tpu_custom_call.1} parent=1 // loop_header_branch
      %16 = sbr.rel (%p14) target = $region8
    $region5: #{tpu_custom_call.1} parent=1 // loop_body
      %s18 = ssub.s32 %s13, 1
      %s19 = ssub.s32 %s13, 2
      %s20 = sadd.s32 %s13, 1
      %s21 = ssub.s32 %s13, %s20
      %p22 = scmp.eq.s32.totalorder %s21, 0
      %s24 = sadd.s32 %s23, 1
      %s25 = scalar_select %p22, %s23, %s24
      %p28 = pneg %p22
      %p29 = scmp.eq.s32.totalorder %s13, 1
      %p30 = por %p28, %p29
      %p31 = scmp.ne.s32.totalorder %s23, %s26
      %p32 = scmp.eq.s32.totalorder %s13, 0
      %p33 = por %p31, %p32
      %p34 = scmp.ne.s32.totalorder %s23, %s26
      %p35 = scmp.eq.s32.totalorder %s18, 1
      %p36 = por %p34, %p35
      %p37 = scmp.ne.s32.totalorder %s26, %s27
      %p38 = scmp.eq.s32.totalorder %s18, 0
      %p39 = por %p37, %p38
      %p40 = scmp.ne.s32.totalorder %s26, %s27
      %p41 = scmp.eq.s32.totalorder %s19, 1
      %p42 = por %p40, %p41
      %p44 = scmp.ne.s32.totalorder %s27, %s43
      %p45 = scmp.eq.s32.totalorder %s19, 0
      %p46 = por %p44, %p45
      %s47 = ssub.s32 %s13, %s20
      %p48 = scmp.eq.s32.totalorder %s47, 0
      %s50 = sadd.s32 %s49, 1
      %s51 = scalar_select %p48, %s49, %s50
      %p54 = pneg %p48
      %p55 = scmp.eq.s32.totalorder %s13, 1
      %p56 = por %p54, %p55
      %p57 = scmp.ne.s32.totalorder %s49, %s52
      %p58 = scmp.eq.s32.totalorder %s13, 0
      %p59 = por %p57, %p58
      %p60 = scmp.ne.s32.totalorder %s49, %s52
      %p61 = scmp.eq.s32.totalorder %s18, 1
      %p62 = por %p60, %p61
      %p63 = scmp.ne.s32.totalorder %s52, %s53
      %p64 = scmp.eq.s32.totalorder %s18, 0
      %p65 = por %p63, %p64
      %p66 = scmp.ne.s32.totalorder %s52, %s53
      %p67 = scmp.eq.s32.totalorder %s19, 1
      %p68 = por %p66, %p67
      %p70 = scmp.ne.s32.totalorder %s53, %s69
      %p71 = scmp.eq.s32.totalorder %s19, 0
      %p72 = por %p70, %p71
      %p73 = scmp.le.s32.totalorder 1, %s13
      %p74 = scmp.lt.s32.totalorder %s13, 3
      %p75 = pnand %p73, %p74
      %p76 = pneg %p75
      // Predicated region
      $region9: #{tpu_custom_call.1} parent=5 // pred_check
        _
      $region10: #{tpu_custom_call.1} parent=5 // pred_check_branch
        %78 = sbr.rel (%p75) target = $region12
      $region11: #{tpu_custom_call.1} parent=5 // pred_region
        %s79 = ssub.s32 %s13, 1
      $region12: #{tpu_custom_call.1} parent=5 // pred_fallthru
        _
      %p80 = scmp.lt.s32.totalorder %s13, 2
      // Predicated region
      $region13: #{tpu_custom_call.1} parent=5 // pred_check
        %p81 = pneg %p80
      $region14: #{tpu_custom_call.1} parent=5 // pred_check_branch
        %83 = sbr.rel (%p81) target = $region16
      $region15: #{tpu_custom_call.1} parent=5 // pred_region
        // Predicated region
        $region17: #{tpu_custom_call.1} parent=15 // pred_check
          %p84 = pneg %p33
        $region18: #{tpu_custom_call.1} parent=15 // pred_check_branch
          %86 = sbr.rel (%p84) target = $region20
        $region19: #{tpu_custom_call.1} parent=15 // pred_region
          %s87 = sand.u32 %s23, 1
          %s88 = scalar_lea.sflag [#allocation3], %s87
          %s89 = sand.u32 %s23, 1
          %s90 = smul.addr %s89, 8
          %s91 = scalar_lea.vmem [#allocation2], %s90
          %s93 = ssub.s32 128, 128
          %94 = vsyncadd %s88, %s93
          %s95 = smul.addr %s13, 128
          %s96 = scalar_lea.hbm %s0, %s95
          %s98 = sshll.u32 %s91, 4
          %s99 = int_to_ptr.vmem [resolvable:$true] %s98
          %101 = dma.hbm_to_vmem [thread:$0]  %s96, 128, %s99, %s88
        $region20: #{tpu_custom_call.1} parent=15 // pred_fallthru
          _
      $region16: #{tpu_custom_call.1} parent=5 // pred_fallthru
        _
      %p102 = scmp.le.s32.totalorder 1, %s13
      %p103 = scmp.lt.s32.totalorder %s13, 3
      %p104 = pnand %p102, %p103
      %p105 = pneg %p104
      // Predicated region
      $region21: #{tpu_custom_call.1} parent=5 // pred_check
        _
      $region22: #{tpu_custom_call.1} parent=5 // pred_check_branch
        %107 = sbr.rel (%p104) target = $region24
      $region23: #{tpu_custom_call.1} parent=5 // pred_region
        %s108 = ssub.s32 %s13, 1
        %s109 = sand.u32 %s26, 1
        %s110 = scalar_lea.sflag [#allocation3], %s109
        %s111 = sand.u32 %s26, 1
        %s112 = smul.addr %s111, 8
        %s113 = scalar_lea.vmem [#allocation2], %s112
        // Predicated region
        $region25: #{tpu_custom_call.1} parent=23 // pred_check
          %p114 = pneg %p39
        $region26: #{tpu_custom_call.1} parent=23 // pred_check_branch
          %116 = sbr.rel (%p114) target = $region28
        $region27: #{tpu_custom_call.1} parent=23 // pred_region
          %117 = dma.done %s110, 128
        $region28: #{tpu_custom_call.1} parent=23 // pred_fallthru
          _
        %s118 = sand.u32 %s26, 1
        %s119 = scalar_lea.sflag [#allocation3], %s118
        %s120 = sand.u32 %s26, 1
        %s121 = smul.addr %s120, 8
        %s122 = scalar_lea.vmem [#allocation2], %s121
        %p123 = pneg %p39
        %p124 = pneg %p36
        %p125 = pneg %p65
        %p126 = pneg %p62
        %s127 = sand.u32 %s52, 1
        %s128 = scalar_lea.sflag [#allocation4], %s127
        %s129 = sand.u32 %s52, 1
        %s130 = smul.addr %s129, 32
        %s131 = scalar_lea.vmem [#allocation5], %s130
        %v132 = vld [vmem:[%s113] sm:$0xff]
        %v133 = vlaneseq
        %v134 = vshrl.u32 %v133, 7
        %v135 = vsub.s32 0, %v134
        %v136 = vrot.slane %v132, %v135
        %138 = vbcast.lane.b32.xlu0 %v136, 256
        %v139 = vpop.permute.xlu0 %138
        %s141 = sor.u32 256, 8
        %142 = vbcast.lane.b32.xlu0 %v136, %s141
        %v143 = vpop.permute.xlu0 %142
        %v144 = vlaneseq
        %v145 = vshrl.u32 %v144, 7
        %v146 = vsub.s32 1, %v145
        %v147 = vrot.slane %v132, %v146
        %149 = vbcast.lane.b32.xlu0 %v147, 256
        %v150 = vpop.permute.xlu0 %149
        %s152 = sor.u32 256, 8
        %153 = vbcast.lane.b32.xlu0 %v147, %s152
        %v154 = vpop.permute.xlu0 %153
        %v155 = vlaneseq
        %v156 = vshrl.u32 %v155, 7
        %v157 = vsub.s32 2, %v156
        %v158 = vrot.slane %v132, %v157
        %160 = vbcast.lane.b32.xlu0 %v158, 256
        %v161 = vpop.permute.xlu0 %160
        %s163 = sor.u32 256, 8
        %164 = vbcast.lane.b32.xlu0 %v158, %s163
        %v165 = vpop.permute.xlu0 %164
        %v166 = vlaneseq
        %v167 = vshrl.u32 %v166, 7
        %v168 = vsub.s32 3, %v167
        %v169 = vrot.slane %v132, %v168
        %171 = vbcast.lane.b32.xlu0 %v169, 256
        %v172 = vpop.permute.xlu0 %171
        %s174 = sor.u32 256, 8
        %175 = vbcast.lane.b32.xlu0 %v169, %s174
        %v176 = vpop.permute.xlu0 %175
        %v177 = vlaneseq
        %v178 = vshrl.u32 %v177, 7
        %v179 = vsub.s32 4, %v178
        %v180 = vrot.slane %v132, %v179
        %182 = vbcast.lane.b32.xlu0 %v180, 256
        %v183 = vpop.permute.xlu0 %182
        %s185 = sor.u32 256, 8
        %186 = vbcast.lane.b32.xlu0 %v180, %s185
        %v187 = vpop.permute.xlu0 %186
        %v188 = vlaneseq
        %v189 = vshrl.u32 %v188, 7
        %v190 = vsub.s32 5, %v189
        %v191 = vrot.slane %v132, %v190
        %193 = vbcast.lane.b32.xlu0 %v191, 256
        %v194 = vpop.permute.xlu0 %193
        %s196 = sor.u32 256, 8
        %197 = vbcast.lane.b32.xlu0 %v191, %s196
        %v198 = vpop.permute.xlu0 %197
        %v199 = vlaneseq
        %v200 = vshrl.u32 %v199, 7
        %v201 = vsub.s32 6, %v200
        %v202 = vrot.slane %v132, %v201
        %204 = vbcast.lane.b32.xlu0 %v202, 256
        %v205 = vpop.permute.xlu0 %204
        %s207 = sor.u32 256, 8
        %208 = vbcast.lane.b32.xlu0 %v202, %s207
        %v209 = vpop.permute.xlu0 %208
        %v210 = vlaneseq
        %v211 = vshrl.u32 %v210, 7
        %v212 = vsub.s32 7, %v211
        %v213 = vrot.slane %v132, %v212
        %215 = vbcast.lane.b32.xlu0 %v213, 256
        %v216 = vpop.permute.xlu0 %215
        %s218 = sor.u32 256, 8
        %219 = vbcast.lane.b32.xlu0 %v213, %s218
        %v220 = vpop.permute.xlu0 %219
        %v221 = vcombine.low %v139, %v161
        %v222 = vcombine.high %v139, %v161
        %v224 = vunpack.c.l.s4 1983009808
        %v225 = vunpack.c.0.s8 %v224
        %v226 = vlaneseq
        %v227 = vshrl.u32 %v226, 7
        %v228 = vsub.s32 %v225, %v227
        %v229 = vrot.slane %v221, %v228
        %v231 = vunpack.c.l.s4 1983009808
        %v232 = vunpack.c.0.s8 %v231
        %v233 = vlaneseq
        %v234 = vshrl.u32 %v233, 7
        %v235 = vsub.s32 %v232, %v234
        %v236 = vrot.slane %v222, %v235
        %v237 = vcombine.low %v150, %v172
        %v238 = vcombine.high %v150, %v172
        %v240 = vunpack.c.l.s4 1983009808
        %v241 = vunpack.c.0.s8 %v240
        %v242 = vlaneseq
        %v243 = vshrl.u32 %v242, 7
        %v244 = vsub.s32 %v241, %v243
        %v245 = vrot.slane %v237, %v244
        %v247 = vunpack.c.l.s4 1983009808
        %v248 = vunpack.c.0.s8 %v247
        %v249 = vlaneseq
        %v250 = vshrl.u32 %v249, 7
        %v251 = vsub.s32 %v248, %v250
        %v252 = vrot.slane %v238, %v251
        %v253 = vcombine.low %v183, %v205
        %v254 = vcombine.high %v183, %v205
        %v256 = vunpack.c.l.s4 1983009808
        %v257 = vunpack.c.0.s8 %v256
        %v258 = vlaneseq
        %v259 = vshrl.u32 %v258, 7
        %v260 = vsub.s32 %v257, %v259
        %v261 = vrot.slane %v253, %v260
        %v263 = vunpack.c.l.s4 1983009808
        %v264 = vunpack.c.0.s8 %v263
        %v265 = vlaneseq
        %v266 = vshrl.u32 %v265, 7
        %v267 = vsub.s32 %v264, %v266
        %v268 = vrot.slane %v254, %v267
        %v269 = vcombine.low %v194, %v216
        %v270 = vcombine.high %v194, %v216
        %v272 = vunpack.c.l.s4 1983009808
        %v273 = vunpack.c.0.s8 %v272
        %v274 = vlaneseq
        %v275 = vshrl.u32 %v274, 7
        %v276 = vsub.s32 %v273, %v275
        %v277 = vrot.slane %v269, %v276
        %v279 = vunpack.c.l.s4 1983009808
        %v280 = vunpack.c.0.s8 %v279
        %v281 = vlaneseq
        %v282 = vshrl.u32 %v281, 7
        %v283 = vsub.s32 %v280, %v282
        %v284 = vrot.slane %v270, %v283
        %v285 = vcombine.low %v229, %v245
        %v286 = vcombine.high %v229, %v245
        %v288 = vunpack.c.l.s4 1934713408
        %v289 = vunpack.c.0.s8 %v288
        %v290 = vlaneseq
        %v291 = vshrl.u32 %v290, 7
        %v292 = vsub.s32 %v289, %v291
        %v293 = vrot.slane %v285, %v292
        %v295 = vunpack.c.l.s4 1934713408
        %v296 = vunpack.c.0.s8 %v295
        %v297 = vlaneseq
        %v298 = vshrl.u32 %v297, 7
        %v299 = vsub.s32 %v296, %v298
        %v300 = vrot.slane %v286, %v299
        %v301 = vcombine.low %v236, %v252
        %v302 = vcombine.high %v236, %v252
        %v304 = vunpack.c.l.s4 1934713408
        %v305 = vunpack.c.0.s8 %v304
        %v306 = vlaneseq
        %v307 = vshrl.u32 %v306, 7
        %v308 = vsub.s32 %v305, %v307
        %v309 = vrot.slane %v301, %v308
        %v311 = vunpack.c.l.s4 1934713408
        %v312 = vunpack.c.0.s8 %v311
        %v313 = vlaneseq
        %v314 = vshrl.u32 %v313, 7
        %v315 = vsub.s32 %v312, %v314
        %v316 = vrot.slane %v302, %v315
        %v317 = vcombine.low %v261, %v277
        %v318 = vcombine.high %v261, %v277
        %v320 = vunpack.c.l.s4 1934713408
        %v321 = vunpack.c.0.s8 %v320
        %v322 = vlaneseq
        %v323 = vshrl.u32 %v322, 7
        %v324 = vsub.s32 %v321, %v323
        %v325 = vrot.slane %v317, %v324
        %v327 = vunpack.c.l.s4 1934713408
        %v328 = vunpack.c.0.s8 %v327
        %v329 = vlaneseq
        %v330 = vshrl.u32 %v329, 7
        %v331 = vsub.s32 %v328, %v330
        %v332 = vrot.slane %v318, %v331
        %v333 = vcombine.low %v268, %v284
        %v334 = vcombine.high %v268, %v284
        %v336 = vunpack.c.l.s4 1934713408
        %v337 = vunpack.c.0.s8 %v336
        %v338 = vlaneseq
        %v339 = vshrl.u32 %v338, 7
        %v340 = vsub.s32 %v337, %v339
        %v341 = vrot.slane %v333, %v340
        %v343 = vunpack.c.l.s4 1934713408
        %v344 = vunpack.c.0.s8 %v343
        %v345 = vlaneseq
        %v346 = vshrl.u32 %v345, 7
        %v347 = vsub.s32 %v344, %v346
        %v348 = vrot.slane %v334, %v347
        %v349 = vcombine.low %v293, %v325
        %v350 = vcombine.high %v293, %v325
        %v351 = vcombine.low %v300, %v332
        %v352 = vcombine.high %v300, %v332
        %v353 = vcombine.low %v309, %v341
        %v354 = vcombine.high %v309, %v341
        %v355 = vcombine.low %v316, %v348
        %v356 = vcombine.high %v316, %v348
        %v357 = vcombine.low %v143, %v165
        %v358 = vcombine.high %v143, %v165
        %v360 = vunpack.c.l.s4 1983009808
        %v361 = vunpack.c.0.s8 %v360
        %v362 = vlaneseq
        %v363 = vshrl.u32 %v362, 7
        %v364 = vsub.s32 %v361, %v363
        %v365 = vrot.slane %v357, %v364
        %v367 = vunpack.c.l.s4 1983009808
        %v368 = vunpack.c.0.s8 %v367
        %v369 = vlaneseq
        %v370 = vshrl.u32 %v369, 7
        %v371 = vsub.s32 %v368, %v370
        %v372 = vrot.slane %v358, %v371
        %v373 = vcombine.low %v154, %v176
        %v374 = vcombine.high %v154, %v176
        %v376 = vunpack.c.l.s4 1983009808
        %v377 = vunpack.c.0.s8 %v376
        %v378 = vlaneseq
        %v379 = vshrl.u32 %v378, 7
        %v380 = vsub.s32 %v377, %v379
        %v381 = vrot.slane %v373, %v380
        %v383 = vunpack.c.l.s4 1983009808
        %v384 = vunpack.c.0.s8 %v383
        %v385 = vlaneseq
        %v386 = vshrl.u32 %v385, 7
        %v387 = vsub.s32 %v384, %v386
        %v388 = vrot.slane %v374, %v387
        %v389 = vcombine.low %v187, %v209
        %v390 = vcombine.high %v187, %v209
        %v392 = vunpack.c.l.s4 1983009808
        %v393 = vunpack.c.0.s8 %v392
        %v394 = vlaneseq
        %v395 = vshrl.u32 %v394, 7
        %v396 = vsub.s32 %v393, %v395
        %v397 = vrot.slane %v389, %v396
        %v399 = vunpack.c.l.s4 1983009808
        %v400 = vunpack.c.0.s8 %v399
        %v401 = vlaneseq
        %v402 = vshrl.u32 %v401, 7
        %v403 = vsub.s32 %v400, %v402
        %v404 = vrot.slane %v390, %v403
        %v405 = vcombine.low %v198, %v220
        %v406 = vcombine.high %v198, %v220
        %v408 = vunpack.c.l.s4 1983009808
        %v409 = vunpack.c.0.s8 %v408
        %v410 = vlaneseq
        %v411 = vshrl.u32 %v410, 7
        %v412 = vsub.s32 %v409, %v411
        %v413 = vrot.slane %v405, %v412
        %v415 = vunpack.c.l.s4 1983009808
        %v416 = vunpack.c.0.s8 %v415
        %v417 = vlaneseq
        %v418 = vshrl.u32 %v417, 7
        %v419 = vsub.s32 %v416, %v418
        %v420 = vrot.slane %v406, %v419
        %v421 = vcombine.low %v365, %v381
        %v422 = vcombine.high %v365, %v381
        %v424 = vunpack.c.l.s4 1934713408
        %v425 = vunpack.c.0.s8 %v424
        %v426 = vlaneseq
        %v427 = vshrl.u32 %v426, 7
        %v428 = vsub.s32 %v425, %v427
        %v429 = vrot.slane %v421, %v428
        %v431 = vunpack.c.l.s4 1934713408
        %v432 = vunpack.c.0.s8 %v431
        %v433 = vlaneseq
        %v434 = vshrl.u32 %v433, 7
        %v435 = vsub.s32 %v432, %v434
        %v436 = vrot.slane %v422, %v435
        %v437 = vcombine.low %v372, %v388
        %v438 = vcombine.high %v372, %v388
        %v440 = vunpack.c.l.s4 1934713408
        %v441 = vunpack.c.0.s8 %v440
        %v442 = vlaneseq
        %v443 = vshrl.u32 %v442, 7
        %v444 = vsub.s32 %v441, %v443
        %v445 = vrot.slane %v437, %v444
        %v447 = vunpack.c.l.s4 1934713408
        %v448 = vunpack.c.0.s8 %v447
        %v449 = vlaneseq
        %v450 = vshrl.u32 %v449, 7
        %v451 = vsub.s32 %v448, %v450
        %v452 = vrot.slane %v438, %v451
        %v453 = vcombine.low %v397, %v413
        %v454 = vcombine.high %v397, %v413
        %v456 = vunpack.c.l.s4 1934713408
        %v457 = vunpack.c.0.s8 %v456
        %v458 = vlaneseq
        %v459 = vshrl.u32 %v458, 7
        %v460 = vsub.s32 %v457, %v459
        %v461 = vrot.slane %v453, %v460
        %v463 = vunpack.c.l.s4 1934713408
        %v464 = vunpack.c.0.s8 %v463
        %v465 = vlaneseq
        %v466 = vshrl.u32 %v465, 7
        %v467 = vsub.s32 %v464, %v466
        %v468 = vrot.slane %v454, %v467
        %v469 = vcombine.low %v404, %v420
        %v470 = vcombine.high %v404, %v420
        %v472 = vunpack.c.l.s4 1934713408
        %v473 = vunpack.c.0.s8 %v472
        %v474 = vlaneseq
        %v475 = vshrl.u32 %v474, 7
        %v476 = vsub.s32 %v473, %v475
        %v477 = vrot.slane %v469, %v476
        %v479 = vunpack.c.l.s4 1934713408
        %v480 = vunpack.c.0.s8 %v479
        %v481 = vlaneseq
        %v482 = vshrl.u32 %v481, 7
        %v483 = vsub.s32 %v480, %v482
        %v484 = vrot.slane %v470, %v483
        %v485 = vcombine.low %v429, %v461
        %v486 = vcombine.high %v429, %v461
        %v487 = vcombine.low %v436, %v468
        %v488 = vcombine.high %v436, %v468
        %v489 = vcombine.low %v445, %v477
        %v490 = vcombine.high %v445, %v477
        %v491 = vcombine.low %v452, %v484
        %v492 = vcombine.high %v452, %v484
        %494 = vrot.lane.b32.xlu0 %v350, 2
        %v495 = vpop.permute.xlu0 %494
        %498 = vrot.lane.b32.xlu0 %v351, 4
        %v499 = vpop.permute.xlu0 %498
        %502 = vrot.lane.b32.xlu0 %v352, 6
        %v503 = vpop.permute.xlu0 %502
        %506 = vrot.lane.b32.xlu0 %v353, 8
        %v507 = vpop.permute.xlu0 %506
        %510 = vrot.lane.b32.xlu0 %v354, 10
        %v511 = vpop.permute.xlu0 %510
        %514 = vrot.lane.b32.xlu0 %v355, 12
        %v515 = vpop.permute.xlu0 %514
        %518 = vrot.lane.b32.xlu0 %v356, 14
        %v519 = vpop.permute.xlu0 %518
        %522 = vrot.lane.b32.xlu0 %v485, 16
        %v523 = vpop.permute.xlu0 %522
        %526 = vrot.lane.b32.xlu0 %v486, 18
        %v527 = vpop.permute.xlu0 %526
        %530 = vrot.lane.b32.xlu0 %v487, 20
        %v531 = vpop.permute.xlu0 %530
        %534 = vrot.lane.b32.xlu0 %v488, 22
        %v535 = vpop.permute.xlu0 %534
        %538 = vrot.lane.b32.xlu0 %v489, 24
        %v539 = vpop.permute.xlu0 %538
        %542 = vrot.lane.b32.xlu0 %v490, 26
        %v543 = vpop.permute.xlu0 %542
        %546 = vrot.lane.b32.xlu0 %v491, 28
        %v547 = vpop.permute.xlu0 %546
        %550 = vrot.lane.b32.xlu0 %v492, 30
        %v551 = vpop.permute.xlu0 %550
        %vm553 = vcmask 15360
        %v554 = vsel %vm553, %v349, %v495
        %vm555 = vcmask 31744
        %v556 = vsel %vm555, %v554, %v499
        %vm557 = vcmask 48128
        %v558 = vsel %vm557, %v556, %v503
        %vm559 = vcmask 64512
        %v560 = vsel %vm559, %v558, %v507
        %vm561 = vcmask 80896
        %v562 = vsel %vm561, %v560, %v511
        %vm563 = vcmask 97280
        %v564 = vsel %vm563, %v562, %v515
        %vm565 = vcmask 113664
        %v566 = vsel %vm565, %v564, %v519
        %vm567 = vcmask 130048
        %v568 = vsel %vm567, %v566, %v523
        %vm569 = vcmask 146432
        %v570 = vsel %vm569, %v568, %v527
        %vm571 = vcmask 162816
        %v572 = vsel %vm571, %v570, %v531
        %vm573 = vcmask 179200
        %v574 = vsel %vm573, %v572, %v535
        %vm575 = vcmask 195584
        %v576 = vsel %vm575, %v574, %v539
        %vm577 = vcmask 211968
        %v578 = vsel %vm577, %v576, %v543
        %vm579 = vcmask 228352
        %v580 = vsel %vm579, %v578, %v547
        %vm581 = vcmask 244736
        %v582 = vsel %vm581, %v580, %v551
        %vm583 = vcmask 261120
        %584 = vst.msk [vmem:[%s131] sm:$0xff] %vm583, %v582
        %586 = vrot.lane.b32.xlu0 %v582, 32
        %v587 = vpop.permute.xlu0 %586
        %vm589 = vcmask 523520
        %590 = vst.msk [vmem:[%s131] sm:$0xff] %vm589, %v587
        %s592 = sor.u32 256, 16
        %593 = vbcast.lane.b32.xlu0 %v136, %s592
        %v594 = vpop.permute.xlu0 %593
        %s596 = sor.u32 256, 24
        %597 = vbcast.lane.b32.xlu0 %v136, %s596
        %v598 = vpop.permute.xlu0 %597
        %s600 = sor.u32 256, 16
        %601 = vbcast.lane.b32.xlu0 %v147, %s600
        %v602 = vpop.permute.xlu0 %601
        %s604 = sor.u32 256, 24
        %605 = vbcast.lane.b32.xlu0 %v147, %s604
        %v606 = vpop.permute.xlu0 %605
        %s608 = sor.u32 256, 16
        %609 = vbcast.lane.b32.xlu0 %v158, %s608
        %v610 = vpop.permute.xlu0 %609
        %s612 = sor.u32 256, 24
        %613 = vbcast.lane.b32.xlu0 %v158, %s612
        %v614 = vpop.permute.xlu0 %613
        %s616 = sor.u32 256, 16
        %617 = vbcast.lane.b32.xlu0 %v169, %s616
        %v618 = vpop.permute.xlu0 %617
        %s620 = sor.u32 256, 24
        %621 = vbcast.lane.b32.xlu0 %v169, %s620
        %v622 = vpop.permute.xlu0 %621
        %s624 = sor.u32 256, 16
        %625 = vbcast.lane.b32.xlu0 %v180, %s624
        %v626 = vpop.permute.xlu0 %625
        %s628 = sor.u32 256, 24
        %629 = vbcast.lane.b32.xlu0 %v180, %s628
        %v630 = vpop.permute.xlu0 %629
        %s632 = sor.u32 256, 16
        %633 = vbcast.lane.b32.xlu0 %v191, %s632
        %v634 = vpop.permute.xlu0 %633
        %s636 = sor.u32 256, 24
        %637 = vbcast.lane.b32.xlu0 %v191, %s636
        %v638 = vpop.permute.xlu0 %637
        %s640 = sor.u32 256, 16
        %641 = vbcast.lane.b32.xlu0 %v202, %s640
        %v642 = vpop.permute.xlu0 %641
        %s644 = sor.u32 256, 24
        %645 = vbcast.lane.b32.xlu0 %v202, %s644
        %v646 = vpop.permute.xlu0 %645
        %s648 = sor.u32 256, 16
        %649 = vbcast.lane.b32.xlu0 %v213, %s648
        %v650 = vpop.permute.xlu0 %649
        %s652 = sor.u32 256, 24
        %653 = vbcast.lane.b32.xlu0 %v213, %s652
        %v654 = vpop.permute.xlu0 %653
        %v655 = vcombine.low %v594, %v610
        %v656 = vcombine.high %v594, %v610
        %v658 = vunpack.c.l.s4 1983009808
        %v659 = vunpack.c.0.s8 %v658
        %v660 = vlaneseq
        %v661 = vshrl.u32 %v660, 7
        %v662 = vsub.s32 %v659, %v661
        %v663 = vrot.slane %v655, %v662
        %v665 = vunpack.c.l.s4 1983009808
        %v666 = vunpack.c.0.s8 %v665
        %v667 = vlaneseq
        %v668 = vshrl.u32 %v667, 7
        %v669 = vsub.s32 %v666, %v668
        %v670 = vrot.slane %v656, %v669
        %v671 = vcombine.low %v602, %v618
        %v672 = vcombine.high %v602, %v618
        %v674 = vunpack.c.l.s4 1983009808
        %v675 = vunpack.c.0.s8 %v674
        %v676 = vlaneseq
        %v677 = vshrl.u32 %v676, 7
        %v678 = vsub.s32 %v675, %v677
        %v679 = vrot.slane %v671, %v678
        %v681 = vunpack.c.l.s4 1983009808
        %v682 = vunpack.c.0.s8 %v681
        %v683 = vlaneseq
        %v684 = vshrl.u32 %v683, 7
        %v685 = vsub.s32 %v682, %v684
        %v686 = vrot.slane %v672, %v685
        %v687 = vcombine.low %v626, %v642
        %v688 = vcombine.high %v626, %v642
        %v690 = vunpack.c.l.s4 1983009808
        %v691 = vunpack.c.0.s8 %v690
        %v692 = vlaneseq
        %v693 = vshrl.u32 %v692, 7
        %v694 = vsub.s32 %v691, %v693
        %v695 = vrot.slane %v687, %v694
        %v697 = vunpack.c.l.s4 1983009808
        %v698 = vunpack.c.0.s8 %v697
        %v699 = vlaneseq
        %v700 = vshrl.u32 %v699, 7
        %v701 = vsub.s32 %v698, %v700
        %v702 = vrot.slane %v688, %v701
        %v703 = vcombine.low %v634, %v650
        %v704 = vcombine.high %v634, %v650
        %v706 = vunpack.c.l.s4 1983009808
        %v707 = vunpack.c.0.s8 %v706
        %v708 = vlaneseq
        %v709 = vshrl.u32 %v708, 7
        %v710 = vsub.s32 %v707, %v709
        %v711 = vrot.slane %v703, %v710
        %v713 = vunpack.c.l.s4 1983009808
        %v714 = vunpack.c.0.s8 %v713
        %v715 = vlaneseq
        %v716 = vshrl.u32 %v715, 7
        %v717 = vsub.s32 %v714, %v716
        %v718 = vrot.slane %v704, %v717
        %v719 = vcombine.low %v663, %v679
        %v720 = vcombine.high %v663, %v679
        %v722 = vunpack.c.l.s4 1934713408
        %v723 = vunpack.c.0.s8 %v722
        %v724 = vlaneseq
        %v725 = vshrl.u32 %v724, 7
        %v726 = vsub.s32 %v723, %v725
        %v727 = vrot.slane %v719, %v726
        %v729 = vunpack.c.l.s4 1934713408
        %v730 = vunpack.c.0.s8 %v729
        %v731 = vlaneseq
        %v732 = vshrl.u32 %v731, 7
        %v733 = vsub.s32 %v730, %v732
        %v734 = vrot.slane %v720, %v733
        %v735 = vcombine.low %v670, %v686
        %v736 = vcombine.high %v670, %v686
        %v738 = vunpack.c.l.s4 1934713408
        %v739 = vunpack.c.0.s8 %v738
        %v740 = vlaneseq
        %v741 = vshrl.u32 %v740, 7
        %v742 = vsub.s32 %v739, %v741
        %v743 = vrot.slane %v735, %v742
        %v745 = vunpack.c.l.s4 1934713408
        %v746 = vunpack.c.0.s8 %v745
        %v747 = vlaneseq
        %v748 = vshrl.u32 %v747, 7
        %v749 = vsub.s32 %v746, %v748
        %v750 = vrot.slane %v736, %v749
        %v751 = vcombine.low %v695, %v711
        %v752 = vcombine.high %v695, %v711
        %v754 = vunpack.c.l.s4 1934713408
        %v755 = vunpack.c.0.s8 %v754
        %v756 = vlaneseq
        %v757 = vshrl.u32 %v756, 7
        %v758 = vsub.s32 %v755, %v757
        %v759 = vrot.slane %v751, %v758
        %v761 = vunpack.c.l.s4 1934713408
        %v762 = vunpack.c.0.s8 %v761
        %v763 = vlaneseq
        %v764 = vshrl.u32 %v763, 7
        %v765 = vsub.s32 %v762, %v764
        %v766 = vrot.slane %v752, %v765
        %v767 = vcombine.low %v702, %v718
        %v768 = vcombine.high %v702, %v718
        %v770 = vunpack.c.l.s4 1934713408
        %v771 = vunpack.c.0.s8 %v770
        %v772 = vlaneseq
        %v773 = vshrl.u32 %v772, 7
        %v774 = vsub.s32 %v771, %v773
        %v775 = vrot.slane %v767, %v774
        %v777 = vunpack.c.l.s4 1934713408
        %v778 = vunpack.c.0.s8 %v777
        %v779 = vlaneseq
        %v780 = vshrl.u32 %v779, 7
        %v781 = vsub.s32 %v778, %v780
        %v782 = vrot.slane %v768, %v781
        %v783 = vcombine.low %v727, %v759
        %v784 = vcombine.high %v727, %v759
        %v785 = vcombine.low %v734, %v766
        %v786 = vcombine.high %v734, %v766
        %v787 = vcombine.low %v743, %v775
        %v788 = vcombine.high %v743, %v775
        %v789 = vcombine.low %v750, %v782
        %v790 = vcombine.high %v750, %v782
        %v791 = vcombine.low %v598, %v614
        %v792 = vcombine.high %v598, %v614
        %v794 = vunpack.c.l.s4 1983009808
        %v795 = vunpack.c.0.s8 %v794
        %v796 = vlaneseq
        %v797 = vshrl.u32 %v796, 7
        %v798 = vsub.s32 %v795, %v797
        %v799 = vrot.slane %v791, %v798
        %v801 = vunpack.c.l.s4 1983009808
        %v802 = vunpack.c.0.s8 %v801
        %v803 = vlaneseq
        %v804 = vshrl.u32 %v803, 7
        %v805 = vsub.s32 %v802, %v804
        %v806 = vrot.slane %v792, %v805
        %v807 = vcombine.low %v606, %v622
        %v808 = vcombine.high %v606, %v622
        %v810 = vunpack.c.l.s4 1983009808
        %v811 = vunpack.c.0.s8 %v810
        %v812 = vlaneseq
        %v813 = vshrl.u32 %v812, 7
        %v814 = vsub.s32 %v811, %v813
        %v815 = vrot.slane %v807, %v814
        %v817 = vunpack.c.l.s4 1983009808
        %v818 = vunpack.c.0.s8 %v817
        %v819 = vlaneseq
        %v820 = vshrl.u32 %v819, 7
        %v821 = vsub.s32 %v818, %v820
        %v822 = vrot.slane %v808, %v821
        %v823 = vcombine.low %v630, %v646
        %v824 = vcombine.high %v630, %v646
        %v826 = vunpack.c.l.s4 1983009808
        %v827 = vunpack.c.0.s8 %v826
        %v828 = vlaneseq
        %v829 = vshrl.u32 %v828, 7
        %v830 = vsub.s32 %v827, %v829
        %v831 = vrot.slane %v823, %v830
        %v833 = vunpack.c.l.s4 1983009808
        %v834 = vunpack.c.0.s8 %v833
        %v835 = vlaneseq
        %v836 = vshrl.u32 %v835, 7
        %v837 = vsub.s32 %v834, %v836
        %v838 = vrot.slane %v824, %v837
        %v839 = vcombine.low %v638, %v654
        %v840 = vcombine.high %v638, %v654
        %v842 = vunpack.c.l.s4 1983009808
        %v843 = vunpack.c.0.s8 %v842
        %v844 = vlaneseq
        %v845 = vshrl.u32 %v844, 7
        %v846 = vsub.s32 %v843, %v845
        %v847 = vrot.slane %v839, %v846
        %v849 = vunpack.c.l.s4 1983009808
        %v850 = vunpack.c.0.s8 %v849
        %v851 = vlaneseq
        %v852 = vshrl.u32 %v851, 7
        %v853 = vsub.s32 %v850, %v852
        %v854 = vrot.slane %v840, %v853
        %v855 = vcombine.low %v799, %v815
        %v856 = vcombine.high %v799, %v815
        %v858 = vunpack.c.l.s4 1934713408
        %v859 = vunpack.c.0.s8 %v858
        %v860 = vlaneseq
        %v861 = vshrl.u32 %v860, 7
        %v862 = vsub.s32 %v859, %v861
        %v863 = vrot.slane %v855, %v862
        %v865 = vunpack.c.l.s4 1934713408
        %v866 = vunpack.c.0.s8 %v865
        %v867 = vlaneseq
        %v868 = vshrl.u32 %v867, 7
        %v869 = vsub.s32 %v866, %v868
        %v870 = vrot.slane %v856, %v869
        %v871 = vcombine.low %v806, %v822
        %v872 = vcombine.high %v806, %v822
        %v874 = vunpack.c.l.s4 1934713408
        %v875 = vunpack.c.0.s8 %v874
        %v876 = vlaneseq
        %v877 = vshrl.u32 %v876, 7
        %v878 = vsub.s32 %v875, %v877
        %v879 = vrot.slane %v871, %v878
        %v881 = vunpack.c.l.s4 1934713408
        %v882 = vunpack.c.0.s8 %v881
        %v883 = vlaneseq
        %v884 = vshrl.u32 %v883, 7
        %v885 = vsub.s32 %v882, %v884
        %v886 = vrot.slane %v872, %v885
        %v887 = vcombine.low %v831, %v847
        %v888 = vcombine.high %v831, %v847
        %v890 = vunpack.c.l.s4 1934713408
        %v891 = vunpack.c.0.s8 %v890
        %v892 = vlaneseq
        %v893 = vshrl.u32 %v892, 7
        %v894 = vsub.s32 %v891, %v893
        %v895 = vrot.slane %v887, %v894
        %v897 = vunpack.c.l.s4 1934713408
        %v898 = vunpack.c.0.s8 %v897
        %v899 = vlaneseq
        %v900 = vshrl.u32 %v899, 7
        %v901 = vsub.s32 %v898, %v900
        %v902 = vrot.slane %v888, %v901
        %v903 = vcombine.low %v838, %v854
        %v904 = vcombine.high %v838, %v854
        %v906 = vunpack.c.l.s4 1934713408
        %v907 = vunpack.c.0.s8 %v906
        %v908 = vlaneseq
        %v909 = vshrl.u32 %v908, 7
        %v910 = vsub.s32 %v907, %v909
        %v911 = vrot.slane %v903, %v910
        %v913 = vunpack.c.l.s4 1934713408
        %v914 = vunpack.c.0.s8 %v913
        %v915 = vlaneseq
        %v916 = vshrl.u32 %v915, 7
        %v917 = vsub.s32 %v914, %v916
        %v918 = vrot.slane %v904, %v917
        %v919 = vcombine.low %v863, %v895
        %v920 = vcombine.high %v863, %v895
        %v921 = vcombine.low %v870, %v902
        %v922 = vcombine.high %v870, %v902
        %v923 = vcombine.low %v879, %v911
        %v924 = vcombine.high %v879, %v911
        %v925 = vcombine.low %v886, %v918
        %v926 = vcombine.high %v886, %v918
        %928 = vrot.lane.b32.xlu0 %v784, 2
        %v929 = vpop.permute.xlu0 %928
        %932 = vrot.lane.b32.xlu0 %v785, 4
        %v933 = vpop.permute.xlu0 %932
        %936 = vrot.lane.b32.xlu0 %v786, 6
        %v937 = vpop.permute.xlu0 %936
        %940 = vrot.lane.b32.xlu0 %v787, 8
        %v941 = vpop.permute.xlu0 %940
        %944 = vrot.lane.b32.xlu0 %v788, 10
        %v945 = vpop.permute.xlu0 %944
        %948 = vrot.lane.b32.xlu0 %v789, 12
        %v949 = vpop.permute.xlu0 %948
        %952 = vrot.lane.b32.xlu0 %v790, 14
        %v953 = vpop.permute.xlu0 %952
        %956 = vrot.lane.b32.xlu0 %v919, 16
        %v957 = vpop.permute.xlu0 %956
        %960 = vrot.lane.b32.xlu0 %v920, 18
        %v961 = vpop.permute.xlu0 %960
        %964 = vrot.lane.b32.xlu0 %v921, 20
        %v965 = vpop.permute.xlu0 %964
        %968 = vrot.lane.b32.xlu0 %v922, 22
        %v969 = vpop.permute.xlu0 %968
        %972 = vrot.lane.b32.xlu0 %v923, 24
        %v973 = vpop.permute.xlu0 %972
        %976 = vrot.lane.b32.xlu0 %v924, 26
        %v977 = vpop.permute.xlu0 %976
        %980 = vrot.lane.b32.xlu0 %v925, 28
        %v981 = vpop.permute.xlu0 %980
        %984 = vrot.lane.b32.xlu0 %v926, 30
        %v985 = vpop.permute.xlu0 %984
        %v987 = vsel %vm553, %v783, %v929
        %v988 = vsel %vm555, %v987, %v933
        %v989 = vsel %vm557, %v988, %v937
        %v990 = vsel %vm559, %v989, %v941
        %v991 = vsel %vm561, %v990, %v945
        %v992 = vsel %vm563, %v991, %v949
        %v993 = vsel %vm565, %v992, %v953
        %v994 = vsel %vm567, %v993, %v957
        %v995 = vsel %vm569, %v994, %v961
        %v996 = vsel %vm571, %v995, %v965
        %v997 = vsel %vm573, %v996, %v969
        %v998 = vsel %vm575, %v997, %v973
        %v999 = vsel %vm577, %v998, %v977
        %v1000 = vsel %vm579, %v999, %v981
        %v1001 = vsel %vm581, %v1000, %v985
        %1003 = vrot.lane.b32.xlu0 %v1001, 64
        %v1004 = vpop.permute.xlu0 %1003
        %vm1006 = vcmask 785920
        %1007 = vst.msk [vmem:[%s131] sm:$0xff] %vm1006, %v1004
        %1008 = vrot.lane.b32.xlu0 %v1001, 96
        %v1009 = vpop.permute.xlu0 %1008
        %vm1011 = vcmask 1048320
        %1012 = vst.msk [vmem:[%s131] sm:$0xff] %vm1011, %v1009
        %s1014 = sor.u32 256, 32
        %1015 = vbcast.lane.b32.xlu0 %v136, %s1014
        %v1016 = vpop.permute.xlu0 %1015
        %s1018 = sor.u32 256, 40
        %1019 = vbcast.lane.b32.xlu0 %v136, %s1018
        %v1020 = vpop.permute.xlu0 %1019
        %s1022 = sor.u32 256, 32
        %1023 = vbcast.lane.b32.xlu0 %v147, %s1022
        %v1024 = vpop.permute.xlu0 %1023
        %s1026 = sor.u32 256, 40
        %1027 = vbcast.lane.b32.xlu0 %v147, %s1026
        %v1028 = vpop.permute.xlu0 %1027
        %s1030 = sor.u32 256, 32
        %1031 = vbcast.lane.b32.xlu0 %v158, %s1030
        %v1032 = vpop.permute.xlu0 %1031
        %s1034 = sor.u32 256, 40
        %1035 = vbcast.lane.b32.xlu0 %v158, %s1034
        %v1036 = vpop.permute.xlu0 %1035
        %s1038 = sor.u32 256, 32
        %1039 = vbcast.lane.b32.xlu0 %v169, %s1038
        %v1040 = vpop.permute.xlu0 %1039
        %s1042 = sor.u32 256, 40
        %1043 = vbcast.lane.b32.xlu0 %v169, %s1042
        %v1044 = vpop.permute.xlu0 %1043
        %s1046 = sor.u32 256, 32
        %1047 = vbcast.lane.b32.xlu0 %v180, %s1046
        %v1048 = vpop.permute.xlu0 %1047
        %s1050 = sor.u32 256, 40
        %1051 = vbcast.lane.b32.xlu0 %v180, %s1050
        %v1052 = vpop.permute.xlu0 %1051
        %s1054 = sor.u32 256, 32
        %1055 = vbcast.lane.b32.xlu0 %v191, %s1054
        %v1056 = vpop.permute.xlu0 %1055
        %s1058 = sor.u32 256, 40
        %1059 = vbcast.lane.b32.xlu0 %v191, %s1058
        %v1060 = vpop.permute.xlu0 %1059
        %s1062 = sor.u32 256, 32
        %1063 = vbcast.lane.b32.xlu0 %v202, %s1062
        %v1064 = vpop.permute.xlu0 %1063
        %s1066 = sor.u32 256, 40
        %1067 = vbcast.lane.b32.xlu0 %v202, %s1066
        %v1068 = vpop.permute.xlu0 %1067
        %s1070 = sor.u32 256, 32
        %1071 = vbcast.lane.b32.xlu0 %v213, %s1070
        %v1072 = vpop.permute.xlu0 %1071
        %s1074 = sor.u32 256, 40
        %1075 = vbcast.lane.b32.xlu0 %v213, %s1074
        %v1076 = vpop.permute.xlu0 %1075
        %v1077 = vcombine.low %v1016, %v1032
        %v1078 = vcombine.high %v1016, %v1032
        %v1080 = vunpack.c.l.s4 1983009808
        %v1081 = vunpack.c.0.s8 %v1080
        %v1082 = vlaneseq
        %v1083 = vshrl.u32 %v1082, 7
        %v1084 = vsub.s32 %v1081, %v1083
        %v1085 = vrot.slane %v1077, %v1084
        %v1087 = vunpack.c.l.s4 1983009808
        %v1088 = vunpack.c.0.s8 %v1087
        %v1089 = vlaneseq
        %v1090 = vshrl.u32 %v1089, 7
        %v1091 = vsub.s32 %v1088, %v1090
        %v1092 = vrot.slane %v1078, %v1091
        %v1093 = vcombine.low %v1024, %v1040
        %v1094 = vcombine.high %v1024, %v1040
        %v1096 = vunpack.c.l.s4 1983009808
        %v1097 = vunpack.c.0.s8 %v1096
        %v1098 = vlaneseq
        %v1099 = vshrl.u32 %v1098, 7
        %v1100 = vsub.s32 %v1097, %v1099
        %v1101 = vrot.slane %v1093, %v1100
        %v1103 = vunpack.c.l.s4 1983009808
        %v1104 = vunpack.c.0.s8 %v1103
        %v1105 = vlaneseq
        %v1106 = vshrl.u32 %v1105, 7
        %v1107 = vsub.s32 %v1104, %v1106
        %v1108 = vrot.slane %v1094, %v1107
        %v1109 = vcombine.low %v1048, %v1064
        %v1110 = vcombine.high %v1048, %v1064
        %v1112 = vunpack.c.l.s4 1983009808
        %v1113 = vunpack.c.0.s8 %v1112
        %v1114 = vlaneseq
        %v1115 = vshrl.u32 %v1114, 7
        %v1116 = vsub.s32 %v1113, %v1115
        %v1117 = vrot.slane %v1109, %v1116
        %v1119 = vunpack.c.l.s4 1983009808
        %v1120 = vunpack.c.0.s8 %v1119
        %v1121 = vlaneseq
        %v1122 = vshrl.u32 %v1121, 7
        %v1123 = vsub.s32 %v1120, %v1122
        %v1124 = vrot.slane %v1110, %v1123
        %v1125 = vcombine.low %v1056, %v1072
        %v1126 = vcombine.high %v1056, %v1072
        %v1128 = vunpack.c.l.s4 1983009808
        %v1129 = vunpack.c.0.s8 %v1128
        %v1130 = vlaneseq
        %v1131 = vshrl.u32 %v1130, 7
        %v1132 = vsub.s32 %v1129, %v1131
        %v1133 = vrot.slane %v1125, %v1132
        %v1135 = vunpack.c.l.s4 1983009808
        %v1136 = vunpack.c.0.s8 %v1135
        %v1137 = vlaneseq
        %v1138 = vshrl.u32 %v1137, 7
        %v1139 = vsub.s32 %v1136, %v1138
        %v1140 = vrot.slane %v1126, %v1139
        %v1141 = vcombine.low %v1085, %v1101
        %v1142 = vcombine.high %v1085, %v1101
        %v1144 = vunpack.c.l.s4 1934713408
        %v1145 = vunpack.c.0.s8 %v1144
        %v1146 = vlaneseq
        %v1147 = vshrl.u32 %v1146, 7
        %v1148 = vsub.s32 %v1145, %v1147
        %v1149 = vrot.slane %v1141, %v1148
        %v1151 = vunpack.c.l.s4 1934713408
        %v1152 = vunpack.c.0.s8 %v1151
        %v1153 = vlaneseq
        %v1154 = vshrl.u32 %v1153, 7
        %v1155 = vsub.s32 %v1152, %v1154
        %v1156 = vrot.slane %v1142, %v1155
        %v1157 = vcombine.low %v1092, %v1108
        %v1158 = vcombine.high %v1092, %v1108
        %v1160 = vunpack.c.l.s4 1934713408
        %v1161 = vunpack.c.0.s8 %v1160
        %v1162 = vlaneseq
        %v1163 = vshrl.u32 %v1162, 7
        %v1164 = vsub.s32 %v1161, %v1163
        %v1165 = vrot.slane %v1157, %v1164
        %v1167 = vunpack.c.l.s4 1934713408
        %v1168 = vunpack.c.0.s8 %v1167
        %v1169 = vlaneseq
        %v1170 = vshrl.u32 %v1169, 7
        %v1171 = vsub.s32 %v1168, %v1170
        %v1172 = vrot.slane %v1158, %v1171
        %v1173 = vcombine.low %v1117, %v1133
        %v1174 = vcombine.high %v1117, %v1133
        %v1176 = vunpack.c.l.s4 1934713408
        %v1177 = vunpack.c.0.s8 %v1176
        %v1178 = vlaneseq
        %v1179 = vshrl.u32 %v1178, 7
        %v1180 = vsub.s32 %v1177, %v1179
        %v1181 = vrot.slane %v1173, %v1180
        %v1183 = vunpack.c.l.s4 1934713408
        %v1184 = vunpack.c.0.s8 %v1183
        %v1185 = vlaneseq
        %v1186 = vshrl.u32 %v1185, 7
        %v1187 = vsub.s32 %v1184, %v1186
        %v1188 = vrot.slane %v1174, %v1187
        %v1189 = vcombine.low %v1124, %v1140
        %v1190 = vcombine.high %v1124, %v1140
        %v1192 = vunpack.c.l.s4 1934713408
        %v1193 = vunpack.c.0.s8 %v1192
        %v1194 = vlaneseq
        %v1195 = vshrl.u32 %v1194, 7
        %v1196 = vsub.s32 %v1193, %v1195
        %v1197 = vrot.slane %v1189, %v1196
        %v1199 = vunpack.c.l.s4 1934713408
        %v1200 = vunpack.c.0.s8 %v1199
        %v1201 = vlaneseq
        %v1202 = vshrl.u32 %v1201, 7
        %v1203 = vsub.s32 %v1200, %v1202
        %v1204 = vrot.slane %v1190, %v1203
        %v1205 = vcombine.low %v1149, %v1181
        %v1206 = vcombine.high %v1149, %v1181
        %v1207 = vcombine.low %v1156, %v1188
        %v1208 = vcombine.high %v1156, %v1188
        %v1209 = vcombine.low %v1165, %v1197
        %v1210 = vcombine.high %v1165, %v1197
        %v1211 = vcombine.low %v1172, %v1204
        %v1212 = vcombine.high %v1172, %v1204
        %v1213 = vcombine.low %v1020, %v1036
        %v1214 = vcombine.high %v1020, %v1036
        %v1216 = vunpack.c.l.s4 1983009808
        %v1217 = vunpack.c.0.s8 %v1216
        %v1218 = vlaneseq
        %v1219 = vshrl.u32 %v1218, 7
        %v1220 = vsub.s32 %v1217, %v1219
        %v1221 = vrot.slane %v1213, %v1220
        %v1223 = vunpack.c.l.s4 1983009808
        %v1224 = vunpack.c.0.s8 %v1223
        %v1225 = vlaneseq
        %v1226 = vshrl.u32 %v1225, 7
        %v1227 = vsub.s32 %v1224, %v1226
        %v1228 = vrot.slane %v1214, %v1227
        %v1229 = vcombine.low %v1028, %v1044
        %v1230 = vcombine.high %v1028, %v1044
        %v1232 = vunpack.c.l.s4 1983009808
        %v1233 = vunpack.c.0.s8 %v1232
        %v1234 = vlaneseq
        %v1235 = vshrl.u32 %v1234, 7
        %v1236 = vsub.s32 %v1233, %v1235
        %v1237 = vrot.slane %v1229, %v1236
        %v1239 = vunpack.c.l.s4 1983009808
        %v1240 = vunpack.c.0.s8 %v1239
        %v1241 = vlaneseq
        %v1242 = vshrl.u32 %v1241, 7
        %v1243 = vsub.s32 %v1240, %v1242
        %v1244 = vrot.slane %v1230, %v1243
        %v1245 = vcombine.low %v1052, %v1068
        %v1246 = vcombine.high %v1052, %v1068
        %v1248 = vunpack.c.l.s4 1983009808
        %v1249 = vunpack.c.0.s8 %v1248
        %v1250 = vlaneseq
        %v1251 = vshrl.u32 %v1250, 7
        %v1252 = vsub.s32 %v1249, %v1251
        %v1253 = vrot.slane %v1245, %v1252
        %v1255 = vunpack.c.l.s4 1983009808
        %v1256 = vunpack.c.0.s8 %v1255
        %v1257 = vlaneseq
        %v1258 = vshrl.u32 %v1257, 7
        %v1259 = vsub.s32 %v1256, %v1258
        %v1260 = vrot.slane %v1246, %v1259
        %v1261 = vcombine.low %v1060, %v1076
        %v1262 = vcombine.high %v1060, %v1076
        %v1264 = vunpack.c.l.s4 1983009808
        %v1265 = vunpack.c.0.s8 %v1264
        %v1266 = vlaneseq
        %v1267 = vshrl.u32 %v1266, 7
        %v1268 = vsub.s32 %v1265, %v1267
        %v1269 = vrot.slane %v1261, %v1268
        %v1271 = vunpack.c.l.s4 1983009808
        %v1272 = vunpack.c.0.s8 %v1271
        %v1273 = vlaneseq
        %v1274 = vshrl.u32 %v1273, 7
        %v1275 = vsub.s32 %v1272, %v1274
        %v1276 = vrot.slane %v1262, %v1275
        %v1277 = vcombine.low %v1221, %v1237
        %v1278 = vcombine.high %v1221, %v1237
        %v1280 = vunpack.c.l.s4 1934713408
        %v1281 = vunpack.c.0.s8 %v1280
        %v1282 = vlaneseq
        %v1283 = vshrl.u32 %v1282, 7
        %v1284 = vsub.s32 %v1281, %v1283
        %v1285 = vrot.slane %v1277, %v1284
        %v1287 = vunpack.c.l.s4 1934713408
        %v1288 = vunpack.c.0.s8 %v1287
        %v1289 = vlaneseq
        %v1290 = vshrl.u32 %v1289, 7
        %v1291 = vsub.s32 %v1288, %v1290
        %v1292 = vrot.slane %v1278, %v1291
        %v1293 = vcombine.low %v1228, %v1244
        %v1294 = vcombine.high %v1228, %v1244
        %v1296 = vunpack.c.l.s4 1934713408
        %v1297 = vunpack.c.0.s8 %v1296
        %v1298 = vlaneseq
        %v1299 = vshrl.u32 %v1298, 7
        %v1300 = vsub.s32 %v1297, %v1299
        %v1301 = vrot.slane %v1293, %v1300
        %v1303 = vunpack.c.l.s4 1934713408
        %v1304 = vunpack.c.0.s8 %v1303
        %v1305 = vlaneseq
        %v1306 = vshrl.u32 %v1305, 7
        %v1307 = vsub.s32 %v1304, %v1306
        %v1308 = vrot.slane %v1294, %v1307
        %v1309 = vcombine.low %v1253, %v1269
        %v1310 = vcombine.high %v1253, %v1269
        %v1312 = vunpack.c.l.s4 1934713408
        %v1313 = vunpack.c.0.s8 %v1312
        %v1314 = vlaneseq
        %v1315 = vshrl.u32 %v1314, 7
        %v1316 = vsub.s32 %v1313, %v1315
        %v1317 = vrot.slane %v1309, %v1316
        %v1319 = vunpack.c.l.s4 1934713408
        %v1320 = vunpack.c.0.s8 %v1319
        %v1321 = vlaneseq
        %v1322 = vshrl.u32 %v1321, 7
        %v1323 = vsub.s32 %v1320, %v1322
        %v1324 = vrot.slane %v1310, %v1323
        %v1325 = vcombine.low %v1260, %v1276
        %v1326 = vcombine.high %v1260, %v1276
        %v1328 = vunpack.c.l.s4 1934713408
        %v1329 = vunpack.c.0.s8 %v1328
        %v1330 = vlaneseq
        %v1331 = vshrl.u32 %v1330, 7
        %v1332 = vsub.s32 %v1329, %v1331
        %v1333 = vrot.slane %v1325, %v1332
        %v1335 = vunpack.c.l.s4 1934713408
        %v1336 = vunpack.c.0.s8 %v1335
        %v1337 = vlaneseq
        %v1338 = vshrl.u32 %v1337, 7
        %v1339 = vsub.s32 %v1336, %v1338
        %v1340 = vrot.slane %v1326, %v1339
        %v1341 = vcombine.low %v1285, %v1317
        %v1342 = vcombine.high %v1285, %v1317
        %v1343 = vcombine.low %v1292, %v1324
        %v1344 = vcombine.high %v1292, %v1324
        %v1345 = vcombine.low %v1301, %v1333
        %v1346 = vcombine.high %v1301, %v1333
        %v1347 = vcombine.low %v1308, %v1340
        %v1348 = vcombine.high %v1308, %v1340
        %1350 = vrot.lane.b32.xlu0 %v1206, 2
        %v1351 = vpop.permute.xlu0 %1350
        %1354 = vrot.lane.b32.xlu0 %v1207, 4
        %v1355 = vpop.permute.xlu0 %1354
        %1358 = vrot.lane.b32.xlu0 %v1208, 6
        %v1359 = vpop.permute.xlu0 %1358
        %1362 = vrot.lane.b32.xlu0 %v1209, 8
        %v1363 = vpop.permute.xlu0 %1362
        %1366 = vrot.lane.b32.xlu0 %v1210, 10
        %v1367 = vpop.permute.xlu0 %1366
        %1370 = vrot.lane.b32.xlu0 %v1211, 12
        %v1371 = vpop.permute.xlu0 %1370
        %1374 = vrot.lane.b32.xlu0 %v1212, 14
        %v1375 = vpop.permute.xlu0 %1374
        %1378 = vrot.lane.b32.xlu0 %v1341, 16
        %v1379 = vpop.permute.xlu0 %1378
        %1382 = vrot.lane.b32.xlu0 %v1342, 18
        %v1383 = vpop.permute.xlu0 %1382
        %1386 = vrot.lane.b32.xlu0 %v1343, 20
        %v1387 = vpop.permute.xlu0 %1386
        %1390 = vrot.lane.b32.xlu0 %v1344, 22
        %v1391 = vpop.permute.xlu0 %1390
        %1394 = vrot.lane.b32.xlu0 %v1345, 24
        %v1395 = vpop.permute.xlu0 %1394
        %1398 = vrot.lane.b32.xlu0 %v1346, 26
        %v1399 = vpop.permute.xlu0 %1398
        %1402 = vrot.lane.b32.xlu0 %v1347, 28
        %v1403 = vpop.permute.xlu0 %1402
        %1406 = vrot.lane.b32.xlu0 %v1348, 30
        %v1407 = vpop.permute.xlu0 %1406
        %v1409 = vsel %vm553, %v1205, %v1351
        %v1410 = vsel %vm555, %v1409, %v1355
        %v1411 = vsel %vm557, %v1410, %v1359
        %v1412 = vsel %vm559, %v1411, %v1363
        %v1413 = vsel %vm561, %v1412, %v1367
        %v1414 = vsel %vm563, %v1413, %v1371
        %v1415 = vsel %vm565, %v1414, %v1375
        %v1416 = vsel %vm567, %v1415, %v1379
        %v1417 = vsel %vm569, %v1416, %v1383
        %v1418 = vsel %vm571, %v1417, %v1387
        %v1419 = vsel %vm573, %v1418, %v1391
        %v1420 = vsel %vm575, %v1419, %v1395
        %v1421 = vsel %vm577, %v1420, %v1399
        %v1422 = vsel %vm579, %v1421, %v1403
        %v1423 = vsel %vm581, %v1422, %v1407
        %1424 = vst.msk [vmem:[%s131 + $0x8] sm:$0xff] %vm583, %v1423
        %1426 = vrot.lane.b32.xlu0 %v1423, 32
        %v1427 = vpop.permute.xlu0 %1426
        %1429 = vst.msk [vmem:[%s131 + $0x8] sm:$0xff] %vm589, %v1427
        %s1431 = sor.u32 256, 48
        %1432 = vbcast.lane.b32.xlu0 %v136, %s1431
        %v1433 = vpop.permute.xlu0 %1432
        %s1435 = sor.u32 256, 56
        %1436 = vbcast.lane.b32.xlu0 %v136, %s1435
        %v1437 = vpop.permute.xlu0 %1436
        %s1439 = sor.u32 256, 48
        %1440 = vbcast.lane.b32.xlu0 %v147, %s1439
        %v1441 = vpop.permute.xlu0 %1440
        %s1443 = sor.u32 256, 56
        %1444 = vbcast.lane.b32.xlu0 %v147, %s1443
        %v1445 = vpop.permute.xlu0 %1444
        %s1447 = sor.u32 256, 48
        %1448 = vbcast.lane.b32.xlu0 %v158, %s1447
        %v1449 = vpop.permute.xlu0 %1448
        %s1451 = sor.u32 256, 56
        %1452 = vbcast.lane.b32.xlu0 %v158, %s1451
        %v1453 = vpop.permute.xlu0 %1452
        %s1455 = sor.u32 256, 48
        %1456 = vbcast.lane.b32.xlu0 %v169, %s1455
        %v1457 = vpop.permute.xlu0 %1456
        %s1459 = sor.u32 256, 56
        %1460 = vbcast.lane.b32.xlu0 %v169, %s1459
        %v1461 = vpop.permute.xlu0 %1460
        %s1463 = sor.u32 256, 48
        %1464 = vbcast.lane.b32.xlu0 %v180, %s1463
        %v1465 = vpop.permute.xlu0 %1464
        %s1467 = sor.u32 256, 56
        %1468 = vbcast.lane.b32.xlu0 %v180, %s1467
        %v1469 = vpop.permute.xlu0 %1468
        %s1471 = sor.u32 256, 48
        %1472 = vbcast.lane.b32.xlu0 %v191, %s1471
        %v1473 = vpop.permute.xlu0 %1472
        %s1475 = sor.u32 256, 56
        %1476 = vbcast.lane.b32.xlu0 %v191, %s1475
        %v1477 = vpop.permute.xlu0 %1476
        %s1479 = sor.u32 256, 48
        %1480 = vbcast.lane.b32.xlu0 %v202, %s1479
        %v1481 = vpop.permute.xlu0 %1480
        %s1483 = sor.u32 256, 56
        %1484 = vbcast.lane.b32.xlu0 %v202, %s1483
        %v1485 = vpop.permute.xlu0 %1484
        %s1487 = sor.u32 256, 48
        %1488 = vbcast.lane.b32.xlu0 %v213, %s1487
        %v1489 = vpop.permute.xlu0 %1488
        %s1491 = sor.u32 256, 56
        %1492 = vbcast.lane.b32.xlu0 %v213, %s1491
        %v1493 = vpop.permute.xlu0 %1492
        %v1494 = vcombine.low %v1433, %v1449
        %v1495 = vcombine.high %v1433, %v1449
        %v1497 = vunpack.c.l.s4 1983009808
        %v1498 = vunpack.c.0.s8 %v1497
        %v1499 = vlaneseq
        %v1500 = vshrl.u32 %v1499, 7
        %v1501 = vsub.s32 %v1498, %v1500
        %v1502 = vrot.slane %v1494, %v1501
        %v1504 = vunpack.c.l.s4 1983009808
        %v1505 = vunpack.c.0.s8 %v1504
        %v1506 = vlaneseq
        %v1507 = vshrl.u32 %v1506, 7
        %v1508 = vsub.s32 %v1505, %v1507
        %v1509 = vrot.slane %v1495, %v1508
        %v1510 = vcombine.low %v1441, %v1457
        %v1511 = vcombine.high %v1441, %v1457
        %v1513 = vunpack.c.l.s4 1983009808
        %v1514 = vunpack.c.0.s8 %v1513
        %v1515 = vlaneseq
        %v1516 = vshrl.u32 %v1515, 7
        %v1517 = vsub.s32 %v1514, %v1516
        %v1518 = vrot.slane %v1510, %v1517
        %v1520 = vunpack.c.l.s4 1983009808
        %v1521 = vunpack.c.0.s8 %v1520
        %v1522 = vlaneseq
        %v1523 = vshrl.u32 %v1522, 7
        %v1524 = vsub.s32 %v1521, %v1523
        %v1525 = vrot.slane %v1511, %v1524
        %v1526 = vcombine.low %v1465, %v1481
        %v1527 = vcombine.high %v1465, %v1481
        %v1529 = vunpack.c.l.s4 1983009808
        %v1530 = vunpack.c.0.s8 %v1529
        %v1531 = vlaneseq
        %v1532 = vshrl.u32 %v1531, 7
        %v1533 = vsub.s32 %v1530, %v1532
        %v1534 = vrot.slane %v1526, %v1533
        %v1536 = vunpack.c.l.s4 1983009808
        %v1537 = vunpack.c.0.s8 %v1536
        %v1538 = vlaneseq
        %v1539 = vshrl.u32 %v1538, 7
        %v1540 = vsub.s32 %v1537, %v1539
        %v1541 = vrot.slane %v1527, %v1540
        %v1542 = vcombine.low %v1473, %v1489
        %v1543 = vcombine.high %v1473, %v1489
        %v1545 = vunpack.c.l.s4 1983009808
        %v1546 = vunpack.c.0.s8 %v1545
        %v1547 = vlaneseq
        %v1548 = vshrl.u32 %v1547, 7
        %v1549 = vsub.s32 %v1546, %v1548
        %v1550 = vrot.slane %v1542, %v1549
        %v1552 = vunpack.c.l.s4 1983009808
        %v1553 = vunpack.c.0.s8 %v1552
        %v1554 = vlaneseq
        %v1555 = vshrl.u32 %v1554, 7
        %v1556 = vsub.s32 %v1553, %v1555
        %v1557 = vrot.slane %v1543, %v1556
        %v1558 = vcombine.low %v1502, %v1518
        %v1559 = vcombine.high %v1502, %v1518
        %v1561 = vunpack.c.l.s4 1934713408
        %v1562 = vunpack.c.0.s8 %v1561
        %v1563 = vlaneseq
        %v1564 = vshrl.u32 %v1563, 7
        %v1565 = vsub.s32 %v1562, %v1564
        %v1566 = vrot.slane %v1558, %v1565
        %v1568 = vunpack.c.l.s4 1934713408
        %v1569 = vunpack.c.0.s8 %v1568
        %v1570 = vlaneseq
        %v1571 = vshrl.u32 %v1570, 7
        %v1572 = vsub.s32 %v1569, %v1571
        %v1573 = vrot.slane %v1559, %v1572
        %v1574 = vcombine.low %v1509, %v1525
        %v1575 = vcombine.high %v1509, %v1525
        %v1577 = vunpack.c.l.s4 1934713408
        %v1578 = vunpack.c.0.s8 %v1577
        %v1579 = vlaneseq
        %v1580 = vshrl.u32 %v1579, 7
        %v1581 = vsub.s32 %v1578, %v1580
        %v1582 = vrot.slane %v1574, %v1581
        %v1584 = vunpack.c.l.s4 1934713408
        %v1585 = vunpack.c.0.s8 %v1584
        %v1586 = vlaneseq
        %v1587 = vshrl.u32 %v1586, 7
        %v1588 = vsub.s32 %v1585, %v1587
        %v1589 = vrot.slane %v1575, %v1588
        %v1590 = vcombine.low %v1534, %v1550
        %v1591 = vcombine.high %v1534, %v1550
        %v1593 = vunpack.c.l.s4 1934713408
        %v1594 = vunpack.c.0.s8 %v1593
        %v1595 = vlaneseq
        %v1596 = vshrl.u32 %v1595, 7
        %v1597 = vsub.s32 %v1594, %v1596
        %v1598 = vrot.slane %v1590, %v1597
        %v1600 = vunpack.c.l.s4 1934713408
        %v1601 = vunpack.c.0.s8 %v1600
        %v1602 = vlaneseq
        %v1603 = vshrl.u32 %v1602, 7
        %v1604 = vsub.s32 %v1601, %v1603
        %v1605 = vrot.slane %v1591, %v1604
        %v1606 = vcombine.low %v1541, %v1557
        %v1607 = vcombine.high %v1541, %v1557
        %v1609 = vunpack.c.l.s4 1934713408
        %v1610 = vunpack.c.0.s8 %v1609
        %v1611 = vlaneseq
        %v1612 = vshrl.u32 %v1611, 7
        %v1613 = vsub.s32 %v1610, %v1612
        %v1614 = vrot.slane %v1606, %v1613
        %v1616 = vunpack.c.l.s4 1934713408
        %v1617 = vunpack.c.0.s8 %v1616
        %v1618 = vlaneseq
        %v1619 = vshrl.u32 %v1618, 7
        %v1620 = vsub.s32 %v1617, %v1619
        %v1621 = vrot.slane %v1607, %v1620
        %v1622 = vcombine.low %v1566, %v1598
        %v1623 = vcombine.high %v1566, %v1598
        %v1624 = vcombine.low %v1573, %v1605
        %v1625 = vcombine.high %v1573, %v1605
        %v1626 = vcombine.low %v1582, %v1614
        %v1627 = vcombine.high %v1582, %v1614
        %v1628 = vcombine.low %v1589, %v1621
        %v1629 = vcombine.high %v1589, %v1621
        %v1630 = vcombine.low %v1437, %v1453
        %v1631 = vcombine.high %v1437, %v1453
        %v1633 = vunpack.c.l.s4 1983009808
        %v1634 = vunpack.c.0.s8 %v1633
        %v1635 = vlaneseq
        %v1636 = vshrl.u32 %v1635, 7
        %v1637 = vsub.s32 %v1634, %v1636
        %v1638 = vrot.slane %v1630, %v1637
        %v1640 = vunpack.c.l.s4 1983009808
        %v1641 = vunpack.c.0.s8 %v1640
        %v1642 = vlaneseq
        %v1643 = vshrl.u32 %v1642, 7
        %v1644 = vsub.s32 %v1641, %v1643
        %v1645 = vrot.slane %v1631, %v1644
        %v1646 = vcombine.low %v1445, %v1461
        %v1647 = vcombine.high %v1445, %v1461
        %v1649 = vunpack.c.l.s4 1983009808
        %v1650 = vunpack.c.0.s8 %v1649
        %v1651 = vlaneseq
        %v1652 = vshrl.u32 %v1651, 7
        %v1653 = vsub.s32 %v1650, %v1652
        %v1654 = vrot.slane %v1646, %v1653
        %v1656 = vunpack.c.l.s4 1983009808
        %v1657 = vunpack.c.0.s8 %v1656
        %v1658 = vlaneseq
        %v1659 = vshrl.u32 %v1658, 7
        %v1660 = vsub.s32 %v1657, %v1659
        %v1661 = vrot.slane %v1647, %v1660
        %v1662 = vcombine.low %v1469, %v1485
        %v1663 = vcombine.high %v1469, %v1485
        %v1665 = vunpack.c.l.s4 1983009808
        %v1666 = vunpack.c.0.s8 %v1665
        %v1667 = vlaneseq
        %v1668 = vshrl.u32 %v1667, 7
        %v1669 = vsub.s32 %v1666, %v1668
        %v1670 = vrot.slane %v1662, %v1669
        %v1672 = vunpack.c.l.s4 1983009808
        %v1673 = vunpack.c.0.s8 %v1672
        %v1674 = vlaneseq
        %v1675 = vshrl.u32 %v1674, 7
        %v1676 = vsub.s32 %v1673, %v1675
        %v1677 = vrot.slane %v1663, %v1676
        %v1678 = vcombine.low %v1477, %v1493
        %v1679 = vcombine.high %v1477, %v1493
        %v1681 = vunpack.c.l.s4 1983009808
        %v1682 = vunpack.c.0.s8 %v1681
        %v1683 = vlaneseq
        %v1684 = vshrl.u32 %v1683, 7
        %v1685 = vsub.s32 %v1682, %v1684
        %v1686 = vrot.slane %v1678, %v1685
        %v1688 = vunpack.c.l.s4 1983009808
        %v1689 = vunpack.c.0.s8 %v1688
        %v1690 = vlaneseq
        %v1691 = vshrl.u32 %v1690, 7
        %v1692 = vsub.s32 %v1689, %v1691
        %v1693 = vrot.slane %v1679, %v1692
        %v1694 = vcombine.low %v1638, %v1654
        %v1695 = vcombine.high %v1638, %v1654
        %v1697 = vunpack.c.l.s4 1934713408
        %v1698 = vunpack.c.0.s8 %v1697
        %v1699 = vlaneseq
        %v1700 = vshrl.u32 %v1699, 7
        %v1701 = vsub.s32 %v1698, %v1700
        %v1702 = vrot.slane %v1694, %v1701
        %v1704 = vunpack.c.l.s4 1934713408
        %v1705 = vunpack.c.0.s8 %v1704
        %v1706 = vlaneseq
        %v1707 = vshrl.u32 %v1706, 7
        %v1708 = vsub.s32 %v1705, %v1707
        %v1709 = vrot.slane %v1695, %v1708
        %v1710 = vcombine.low %v1645, %v1661
        %v1711 = vcombine.high %v1645, %v1661
        %v1713 = vunpack.c.l.s4 1934713408
        %v1714 = vunpack.c.0.s8 %v1713
        %v1715 = vlaneseq
        %v1716 = vshrl.u32 %v1715, 7
        %v1717 = vsub.s32 %v1714, %v1716
        %v1718 = vrot.slane %v1710, %v1717
        %v1720 = vunpack.c.l.s4 1934713408
        %v1721 = vunpack.c.0.s8 %v1720
        %v1722 = vlaneseq
        %v1723 = vshrl.u32 %v1722, 7
        %v1724 = vsub.s32 %v1721, %v1723
        %v1725 = vrot.slane %v1711, %v1724
        %v1726 = vcombine.low %v1670, %v1686
        %v1727 = vcombine.high %v1670, %v1686
        %v1729 = vunpack.c.l.s4 1934713408
        %v1730 = vunpack.c.0.s8 %v1729
        %v1731 = vlaneseq
        %v1732 = vshrl.u32 %v1731, 7
        %v1733 = vsub.s32 %v1730, %v1732
        %v1734 = vrot.slane %v1726, %v1733
        %v1736 = vunpack.c.l.s4 1934713408
        %v1737 = vunpack.c.0.s8 %v1736
        %v1738 = vlaneseq
        %v1739 = vshrl.u32 %v1738, 7
        %v1740 = vsub.s32 %v1737, %v1739
        %v1741 = vrot.slane %v1727, %v1740
        %v1742 = vcombine.low %v1677, %v1693
        %v1743 = vcombine.high %v1677, %v1693
        %v1745 = vunpack.c.l.s4 1934713408
        %v1746 = vunpack.c.0.s8 %v1745
        %v1747 = vlaneseq
        %v1748 = vshrl.u32 %v1747, 7
        %v1749 = vsub.s32 %v1746, %v1748
        %v1750 = vrot.slane %v1742, %v1749
        %v1752 = vunpack.c.l.s4 1934713408
        %v1753 = vunpack.c.0.s8 %v1752
        %v1754 = vlaneseq
        %v1755 = vshrl.u32 %v1754, 7
        %v1756 = vsub.s32 %v1753, %v1755
        %v1757 = vrot.slane %v1743, %v1756
        %v1758 = vcombine.low %v1702, %v1734
        %v1759 = vcombine.high %v1702, %v1734
        %v1760 = vcombine.low %v1709, %v1741
        %v1761 = vcombine.high %v1709, %v1741
        %v1762 = vcombine.low %v1718, %v1750
        %v1763 = vcombine.high %v1718, %v1750
        %v1764 = vcombine.low %v1725, %v1757
        %v1765 = vcombine.high %v1725, %v1757
        %1767 = vrot.lane.b32.xlu0 %v1623, 2
        %v1768 = vpop.permute.xlu0 %1767
        %1771 = vrot.lane.b32.xlu0 %v1624, 4
        %v1772 = vpop.permute.xlu0 %1771
        %1775 = vrot.lane.b32.xlu0 %v1625, 6
        %v1776 = vpop.permute.xlu0 %1775
        %1779 = vrot.lane.b32.xlu0 %v1626, 8
        %v1780 = vpop.permute.xlu0 %1779
        %1783 = vrot.lane.b32.xlu0 %v1627, 10
        %v1784 = vpop.permute.xlu0 %1783
        %1787 = vrot.lane.b32.xlu0 %v1628, 12
        %v1788 = vpop.permute.xlu0 %1787
        %1791 = vrot.lane.b32.xlu0 %v1629, 14
        %v1792 = vpop.permute.xlu0 %1791
        %1795 = vrot.lane.b32.xlu0 %v1758, 16
        %v1796 = vpop.permute.xlu0 %1795
        %1799 = vrot.lane.b32.xlu0 %v1759, 18
        %v1800 = vpop.permute.xlu0 %1799
        %1803 = vrot.lane.b32.xlu0 %v1760, 20
        %v1804 = vpop.permute.xlu0 %1803
        %1807 = vrot.lane.b32.xlu0 %v1761, 22
        %v1808 = vpop.permute.xlu0 %1807
        %1811 = vrot.lane.b32.xlu0 %v1762, 24
        %v1812 = vpop.permute.xlu0 %1811
        %1815 = vrot.lane.b32.xlu0 %v1763, 26
        %v1816 = vpop.permute.xlu0 %1815
        %1819 = vrot.lane.b32.xlu0 %v1764, 28
        %v1820 = vpop.permute.xlu0 %1819
        %1823 = vrot.lane.b32.xlu0 %v1765, 30
        %v1824 = vpop.permute.xlu0 %1823
        %v1826 = vsel %vm553, %v1622, %v1768
        %v1827 = vsel %vm555, %v1826, %v1772
        %v1828 = vsel %vm557, %v1827, %v1776
        %v1829 = vsel %vm559, %v1828, %v1780
        %v1830 = vsel %vm561, %v1829, %v1784
        %v1831 = vsel %vm563, %v1830, %v1788
        %v1832 = vsel %vm565, %v1831, %v1792
        %v1833 = vsel %vm567, %v1832, %v1796
        %v1834 = vsel %vm569, %v1833, %v1800
        %v1835 = vsel %vm571, %v1834, %v1804
        %v1836 = vsel %vm573, %v1835, %v1808
        %v1837 = vsel %vm575, %v1836, %v1812
        %v1838 = vsel %vm577, %v1837, %v1816
        %v1839 = vsel %vm579, %v1838, %v1820
        %v1840 = vsel %vm581, %v1839, %v1824
        %1842 = vrot.lane.b32.xlu0 %v1840, 64
        %v1843 = vpop.permute.xlu0 %1842
        %1845 = vst.msk [vmem:[%s131 + $0x8] sm:$0xff] %vm1006, %v1843
        %1846 = vrot.lane.b32.xlu0 %v1840, 96
        %v1847 = vpop.permute.xlu0 %1846
        %1849 = vst.msk [vmem:[%s131 + $0x8] sm:$0xff] %vm1011, %v1847
        %s1851 = sor.u32 256, 64
        %1852 = vbcast.lane.b32.xlu0 %v136, %s1851
        %v1853 = vpop.permute.xlu0 %1852
        %s1855 = sor.u32 256, 72
        %1856 = vbcast.lane.b32.xlu0 %v136, %s1855
        %v1857 = vpop.permute.xlu0 %1856
        %s1859 = sor.u32 256, 64
        %1860 = vbcast.lane.b32.xlu0 %v147, %s1859
        %v1861 = vpop.permute.xlu0 %1860
        %s1863 = sor.u32 256, 72
        %1864 = vbcast.lane.b32.xlu0 %v147, %s1863
        %v1865 = vpop.permute.xlu0 %1864
        %s1867 = sor.u32 256, 64
        %1868 = vbcast.lane.b32.xlu0 %v158, %s1867
        %v1869 = vpop.permute.xlu0 %1868
        %s1871 = sor.u32 256, 72
        %1872 = vbcast.lane.b32.xlu0 %v158, %s1871
        %v1873 = vpop.permute.xlu0 %1872
        %s1875 = sor.u32 256, 64
        %1876 = vbcast.lane.b32.xlu0 %v169, %s1875
        %v1877 = vpop.permute.xlu0 %1876
        %s1879 = sor.u32 256, 72
        %1880 = vbcast.lane.b32.xlu0 %v169, %s1879
        %v1881 = vpop.permute.xlu0 %1880
        %s1883 = sor.u32 256, 64
        %1884 = vbcast.lane.b32.xlu0 %v180, %s1883
        %v1885 = vpop.permute.xlu0 %1884
        %s1887 = sor.u32 256, 72
        %1888 = vbcast.lane.b32.xlu0 %v180, %s1887
        %v1889 = vpop.permute.xlu0 %1888
        %s1891 = sor.u32 256, 64
        %1892 = vbcast.lane.b32.xlu0 %v191, %s1891
        %v1893 = vpop.permute.xlu0 %1892
        %s1895 = sor.u32 256, 72
        %1896 = vbcast.lane.b32.xlu0 %v191, %s1895
        %v1897 = vpop.permute.xlu0 %1896
        %s1899 = sor.u32 256, 64
        %1900 = vbcast.lane.b32.xlu0 %v202, %s1899
        %v1901 = vpop.permute.xlu0 %1900
        %s1903 = sor.u32 256, 72
        %1904 = vbcast.lane.b32.xlu0 %v202, %s1903
        %v1905 = vpop.permute.xlu0 %1904
        %s1907 = sor.u32 256, 64
        %1908 = vbcast.lane.b32.xlu0 %v213, %s1907
        %v1909 = vpop.permute.xlu0 %1908
        %s1911 = sor.u32 256, 72
        %1912 = vbcast.lane.b32.xlu0 %v213, %s1911
        %v1913 = vpop.permute.xlu0 %1912
        %v1914 = vcombine.low %v1853, %v1869
        %v1915 = vcombine.high %v1853, %v1869
        %v1917 = vunpack.c.l.s4 1983009808
        %v1918 = vunpack.c.0.s8 %v1917
        %v1919 = vlaneseq
        %v1920 = vshrl.u32 %v1919, 7
        %v1921 = vsub.s32 %v1918, %v1920
        %v1922 = vrot.slane %v1914, %v1921
        %v1924 = vunpack.c.l.s4 1983009808
        %v1925 = vunpack.c.0.s8 %v1924
        %v1926 = vlaneseq
        %v1927 = vshrl.u32 %v1926, 7
        %v1928 = vsub.s32 %v1925, %v1927
        %v1929 = vrot.slane %v1915, %v1928
        %v1930 = vcombine.low %v1861, %v1877
        %v1931 = vcombine.high %v1861, %v1877
        %v1933 = vunpack.c.l.s4 1983009808
        %v1934 = vunpack.c.0.s8 %v1933
        %v1935 = vlaneseq
        %v1936 = vshrl.u32 %v1935, 7
        %v1937 = vsub.s32 %v1934, %v1936
        %v1938 = vrot.slane %v1930, %v1937
        %v1940 = vunpack.c.l.s4 1983009808
        %v1941 = vunpack.c.0.s8 %v1940
        %v1942 = vlaneseq
        %v1943 = vshrl.u32 %v1942, 7
        %v1944 = vsub.s32 %v1941, %v1943
        %v1945 = vrot.slane %v1931, %v1944
        %v1946 = vcombine.low %v1885, %v1901
        %v1947 = vcombine.high %v1885, %v1901
        %v1949 = vunpack.c.l.s4 1983009808
        %v1950 = vunpack.c.0.s8 %v1949
        %v1951 = vlaneseq
        %v1952 = vshrl.u32 %v1951, 7
        %v1953 = vsub.s32 %v1950, %v1952
        %v1954 = vrot.slane %v1946, %v1953
        %v1956 = vunpack.c.l.s4 1983009808
        %v1957 = vunpack.c.0.s8 %v1956
        %v1958 = vlaneseq
        %v1959 = vshrl.u32 %v1958, 7
        %v1960 = vsub.s32 %v1957, %v1959
        %v1961 = vrot.slane %v1947, %v1960
        %v1962 = vcombine.low %v1893, %v1909
        %v1963 = vcombine.high %v1893, %v1909
        %v1965 = vunpack.c.l.s4 1983009808
        %v1966 = vunpack.c.0.s8 %v1965
        %v1967 = vlaneseq
        %v1968 = vshrl.u32 %v1967, 7
        %v1969 = vsub.s32 %v1966, %v1968
        %v1970 = vrot.slane %v1962, %v1969
        %v1972 = vunpack.c.l.s4 1983009808
        %v1973 = vunpack.c.0.s8 %v1972
        %v1974 = vlaneseq
        %v1975 = vshrl.u32 %v1974, 7
        %v1976 = vsub.s32 %v1973, %v1975
        %v1977 = vrot.slane %v1963, %v1976
        %v1978 = vcombine.low %v1922, %v1938
        %v1979 = vcombine.high %v1922, %v1938
        %v1981 = vunpack.c.l.s4 1934713408
        %v1982 = vunpack.c.0.s8 %v1981
        %v1983 = vlaneseq
        %v1984 = vshrl.u32 %v1983, 7
        %v1985 = vsub.s32 %v1982, %v1984
        %v1986 = vrot.slane %v1978, %v1985
        %v1988 = vunpack.c.l.s4 1934713408
        %v1989 = vunpack.c.0.s8 %v1988
        %v1990 = vlaneseq
        %v1991 = vshrl.u32 %v1990, 7
        %v1992 = vsub.s32 %v1989, %v1991
        %v1993 = vrot.slane %v1979, %v1992
        %v1994 = vcombine.low %v1929, %v1945
        %v1995 = vcombine.high %v1929, %v1945
        %v1997 = vunpack.c.l.s4 1934713408
        %v1998 = vunpack.c.0.s8 %v1997
        %v1999 = vlaneseq
        %v2000 = vshrl.u32 %v1999, 7
        %v2001 = vsub.s32 %v1998, %v2000
        %v2002 = vrot.slane %v1994, %v2001
        %v2004 = vunpack.c.l.s4 1934713408
        %v2005 = vunpack.c.0.s8 %v2004
        %v2006 = vlaneseq
        %v2007 = vshrl.u32 %v2006, 7
        %v2008 = vsub.s32 %v2005, %v2007
        %v2009 = vrot.slane %v1995, %v2008
        %v2010 = vcombine.low %v1954, %v1970
        %v2011 = vcombine.high %v1954, %v1970
        %v2013 = vunpack.c.l.s4 1934713408
        %v2014 = vunpack.c.0.s8 %v2013
        %v2015 = vlaneseq
        %v2016 = vshrl.u32 %v2015, 7
        %v2017 = vsub.s32 %v2014, %v2016
        %v2018 = vrot.slane %v2010, %v2017
        %v2020 = vunpack.c.l.s4 1934713408
        %v2021 = vunpack.c.0.s8 %v2020
        %v2022 = vlaneseq
        %v2023 = vshrl.u32 %v2022, 7
        %v2024 = vsub.s32 %v2021, %v2023
        %v2025 = vrot.slane %v2011, %v2024
        %v2026 = vcombine.low %v1961, %v1977
        %v2027 = vcombine.high %v1961, %v1977
        %v2029 = vunpack.c.l.s4 1934713408
        %v2030 = vunpack.c.0.s8 %v2029
        %v2031 = vlaneseq
        %v2032 = vshrl.u32 %v2031, 7
        %v2033 = vsub.s32 %v2030, %v2032
        %v2034 = vrot.slane %v2026, %v2033
        %v2036 = vunpack.c.l.s4 1934713408
        %v2037 = vunpack.c.0.s8 %v2036
        %v2038 = vlaneseq
        %v2039 = vshrl.u32 %v2038, 7
        %v2040 = vsub.s32 %v2037, %v2039
        %v2041 = vrot.slane %v2027, %v2040
        %v2042 = vcombine.low %v1986, %v2018
        %v2043 = vcombine.high %v1986, %v2018
        %v2044 = vcombine.low %v1993, %v2025
        %v2045 = vcombine.high %v1993, %v2025
        %v2046 = vcombine.low %v2002, %v2034
        %v2047 = vcombine.high %v2002, %v2034
        %v2048 = vcombine.low %v2009, %v2041
        %v2049 = vcombine.high %v2009, %v2041
        %v2050 = vcombine.low %v1857, %v1873
        %v2051 = vcombine.high %v1857, %v1873
        %v2053 = vunpack.c.l.s4 1983009808
        %v2054 = vunpack.c.0.s8 %v2053
        %v2055 = vlaneseq
        %v2056 = vshrl.u32 %v2055, 7
        %v2057 = vsub.s32 %v2054, %v2056
        %v2058 = vrot.slane %v2050, %v2057
        %v2060 = vunpack.c.l.s4 1983009808
        %v2061 = vunpack.c.0.s8 %v2060
        %v2062 = vlaneseq
        %v2063 = vshrl.u32 %v2062, 7
        %v2064 = vsub.s32 %v2061, %v2063
        %v2065 = vrot.slane %v2051, %v2064
        %v2066 = vcombine.low %v1865, %v1881
        %v2067 = vcombine.high %v1865, %v1881
        %v2069 = vunpack.c.l.s4 1983009808
        %v2070 = vunpack.c.0.s8 %v2069
        %v2071 = vlaneseq
        %v2072 = vshrl.u32 %v2071, 7
        %v2073 = vsub.s32 %v2070, %v2072
        %v2074 = vrot.slane %v2066, %v2073
        %v2076 = vunpack.c.l.s4 1983009808
        %v2077 = vunpack.c.0.s8 %v2076
        %v2078 = vlaneseq
        %v2079 = vshrl.u32 %v2078, 7
        %v2080 = vsub.s32 %v2077, %v2079
        %v2081 = vrot.slane %v2067, %v2080
        %v2082 = vcombine.low %v1889, %v1905
        %v2083 = vcombine.high %v1889, %v1905
        %v2085 = vunpack.c.l.s4 1983009808
        %v2086 = vunpack.c.0.s8 %v2085
        %v2087 = vlaneseq
        %v2088 = vshrl.u32 %v2087, 7
        %v2089 = vsub.s32 %v2086, %v2088
        %v2090 = vrot.slane %v2082, %v2089
        %v2092 = vunpack.c.l.s4 1983009808
        %v2093 = vunpack.c.0.s8 %v2092
        %v2094 = vlaneseq
        %v2095 = vshrl.u32 %v2094, 7
        %v2096 = vsub.s32 %v2093, %v2095
        %v2097 = vrot.slane %v2083, %v2096
        %v2098 = vcombine.low %v1897, %v1913
        %v2099 = vcombine.high %v1897, %v1913
        %v2101 = vunpack.c.l.s4 1983009808
        %v2102 = vunpack.c.0.s8 %v2101
        %v2103 = vlaneseq
        %v2104 = vshrl.u32 %v2103, 7
        %v2105 = vsub.s32 %v2102, %v2104
        %v2106 = vrot.slane %v2098, %v2105
        %v2108 = vunpack.c.l.s4 1983009808
        %v2109 = vunpack.c.0.s8 %v2108
        %v2110 = vlaneseq
        %v2111 = vshrl.u32 %v2110, 7
        %v2112 = vsub.s32 %v2109, %v2111
        %v2113 = vrot.slane %v2099, %v2112
        %v2114 = vcombine.low %v2058, %v2074
        %v2115 = vcombine.high %v2058, %v2074
        %v2117 = vunpack.c.l.s4 1934713408
        %v2118 = vunpack.c.0.s8 %v2117
        %v2119 = vlaneseq
        %v2120 = vshrl.u32 %v2119, 7
        %v2121 = vsub.s32 %v2118, %v2120
        %v2122 = vrot.slane %v2114, %v2121
        %v2124 = vunpack.c.l.s4 1934713408
        %v2125 = vunpack.c.0.s8 %v2124
        %v2126 = vlaneseq
        %v2127 = vshrl.u32 %v2126, 7
        %v2128 = vsub.s32 %v2125, %v2127
        %v2129 = vrot.slane %v2115, %v2128
        %v2130 = vcombine.low %v2065, %v2081
        %v2131 = vcombine.high %v2065, %v2081
        %v2133 = vunpack.c.l.s4 1934713408
        %v2134 = vunpack.c.0.s8 %v2133
        %v2135 = vlaneseq
        %v2136 = vshrl.u32 %v2135, 7
        %v2137 = vsub.s32 %v2134, %v2136
        %v2138 = vrot.slane %v2130, %v2137
        %v2140 = vunpack.c.l.s4 1934713408
        %v2141 = vunpack.c.0.s8 %v2140
        %v2142 = vlaneseq
        %v2143 = vshrl.u32 %v2142, 7
        %v2144 = vsub.s32 %v2141, %v2143
        %v2145 = vrot.slane %v2131, %v2144
        %v2146 = vcombine.low %v2090, %v2106
        %v2147 = vcombine.high %v2090, %v2106
        %v2149 = vunpack.c.l.s4 1934713408
        %v2150 = vunpack.c.0.s8 %v2149
        %v2151 = vlaneseq
        %v2152 = vshrl.u32 %v2151, 7
        %v2153 = vsub.s32 %v2150, %v2152
        %v2154 = vrot.slane %v2146, %v2153
        %v2156 = vunpack.c.l.s4 1934713408
        %v2157 = vunpack.c.0.s8 %v2156
        %v2158 = vlaneseq
        %v2159 = vshrl.u32 %v2158, 7
        %v2160 = vsub.s32 %v2157, %v2159
        %v2161 = vrot.slane %v2147, %v2160
        %v2162 = vcombine.low %v2097, %v2113
        %v2163 = vcombine.high %v2097, %v2113
        %v2165 = vunpack.c.l.s4 1934713408
        %v2166 = vunpack.c.0.s8 %v2165
        %v2167 = vlaneseq
        %v2168 = vshrl.u32 %v2167, 7
        %v2169 = vsub.s32 %v2166, %v2168
        %v2170 = vrot.slane %v2162, %v2169
        %v2172 = vunpack.c.l.s4 1934713408
        %v2173 = vunpack.c.0.s8 %v2172
        %v2174 = vlaneseq
        %v2175 = vshrl.u32 %v2174, 7
        %v2176 = vsub.s32 %v2173, %v2175
        %v2177 = vrot.slane %v2163, %v2176
        %v2178 = vcombine.low %v2122, %v2154
        %v2179 = vcombine.high %v2122, %v2154
        %v2180 = vcombine.low %v2129, %v2161
        %v2181 = vcombine.high %v2129, %v2161
        %v2182 = vcombine.low %v2138, %v2170
        %v2183 = vcombine.high %v2138, %v2170
        %v2184 = vcombine.low %v2145, %v2177
        %v2185 = vcombine.high %v2145, %v2177
        %2187 = vrot.lane.b32.xlu0 %v2043, 2
        %v2188 = vpop.permute.xlu0 %2187
        %2191 = vrot.lane.b32.xlu0 %v2044, 4
        %v2192 = vpop.permute.xlu0 %2191
        %2195 = vrot.lane.b32.xlu0 %v2045, 6
        %v2196 = vpop.permute.xlu0 %2195
        %2199 = vrot.lane.b32.xlu0 %v2046, 8
        %v2200 = vpop.permute.xlu0 %2199
        %2203 = vrot.lane.b32.xlu0 %v2047, 10
        %v2204 = vpop.permute.xlu0 %2203
        %2207 = vrot.lane.b32.xlu0 %v2048, 12
        %v2208 = vpop.permute.xlu0 %2207
        %2211 = vrot.lane.b32.xlu0 %v2049, 14
        %v2212 = vpop.permute.xlu0 %2211
        %2215 = vrot.lane.b32.xlu0 %v2178, 16
        %v2216 = vpop.permute.xlu0 %2215
        %2219 = vrot.lane.b32.xlu0 %v2179, 18
        %v2220 = vpop.permute.xlu0 %2219
        %2223 = vrot.lane.b32.xlu0 %v2180, 20
        %v2224 = vpop.permute.xlu0 %2223
        %2227 = vrot.lane.b32.xlu0 %v2181, 22
        %v2228 = vpop.permute.xlu0 %2227
        %2231 = vrot.lane.b32.xlu0 %v2182, 24
        %v2232 = vpop.permute.xlu0 %2231
        %2235 = vrot.lane.b32.xlu0 %v2183, 26
        %v2236 = vpop.permute.xlu0 %2235
        %2239 = vrot.lane.b32.xlu0 %v2184, 28
        %v2240 = vpop.permute.xlu0 %2239
        %2243 = vrot.lane.b32.xlu0 %v2185, 30
        %v2244 = vpop.permute.xlu0 %2243
        %v2246 = vsel %vm553, %v2042, %v2188
        %v2247 = vsel %vm555, %v2246, %v2192
        %v2248 = vsel %vm557, %v2247, %v2196
        %v2249 = vsel %vm559, %v2248, %v2200
        %v2250 = vsel %vm561, %v2249, %v2204
        %v2251 = vsel %vm563, %v2250, %v2208
        %v2252 = vsel %vm565, %v2251, %v2212
        %v2253 = vsel %vm567, %v2252, %v2216
        %v2254 = vsel %vm569, %v2253, %v2220
        %v2255 = vsel %vm571, %v2254, %v2224
        %v2256 = vsel %vm573, %v2255, %v2228
        %v2257 = vsel %vm575, %v2256, %v2232
        %v2258 = vsel %vm577, %v2257, %v2236
        %v2259 = vsel %vm579, %v2258, %v2240
        %v2260 = vsel %vm581, %v2259, %v2244
        %2261 = vst.msk [vmem:[%s131 + $0x10] sm:$0xff] %vm583, %v2260
        %2263 = vrot.lane.b32.xlu0 %v2260, 32
        %v2264 = vpop.permute.xlu0 %2263
        %2266 = vst.msk [vmem:[%s131 + $0x10] sm:$0xff] %vm589, %v2264
        %s2268 = sor.u32 256, 80
        %2269 = vbcast.lane.b32.xlu0 %v136, %s2268
        %v2270 = vpop.permute.xlu0 %2269
        %s2272 = sor.u32 256, 88
        %2273 = vbcast.lane.b32.xlu0 %v136, %s2272
        %v2274 = vpop.permute.xlu0 %2273
        %s2276 = sor.u32 256, 80
        %2277 = vbcast.lane.b32.xlu0 %v147, %s2276
        %v2278 = vpop.permute.xlu0 %2277
        %s2280 = sor.u32 256, 88
        %2281 = vbcast.lane.b32.xlu0 %v147, %s2280
        %v2282 = vpop.permute.xlu0 %2281
        %s2284 = sor.u32 256, 80
        %2285 = vbcast.lane.b32.xlu0 %v158, %s2284
        %v2286 = vpop.permute.xlu0 %2285
        %s2288 = sor.u32 256, 88
        %2289 = vbcast.lane.b32.xlu0 %v158, %s2288
        %v2290 = vpop.permute.xlu0 %2289
        %s2292 = sor.u32 256, 80
        %2293 = vbcast.lane.b32.xlu0 %v169, %s2292
        %v2294 = vpop.permute.xlu0 %2293
        %s2296 = sor.u32 256, 88
        %2297 = vbcast.lane.b32.xlu0 %v169, %s2296
        %v2298 = vpop.permute.xlu0 %2297
        %s2300 = sor.u32 256, 80
        %2301 = vbcast.lane.b32.xlu0 %v180, %s2300
        %v2302 = vpop.permute.xlu0 %2301
        %s2304 = sor.u32 256, 88
        %2305 = vbcast.lane.b32.xlu0 %v180, %s2304
        %v2306 = vpop.permute.xlu0 %2305
        %s2308 = sor.u32 256, 80
        %2309 = vbcast.lane.b32.xlu0 %v191, %s2308
        %v2310 = vpop.permute.xlu0 %2309
        %s2312 = sor.u32 256, 88
        %2313 = vbcast.lane.b32.xlu0 %v191, %s2312
        %v2314 = vpop.permute.xlu0 %2313
        %s2316 = sor.u32 256, 80
        %2317 = vbcast.lane.b32.xlu0 %v202, %s2316
        %v2318 = vpop.permute.xlu0 %2317
        %s2320 = sor.u32 256, 88
        %2321 = vbcast.lane.b32.xlu0 %v202, %s2320
        %v2322 = vpop.permute.xlu0 %2321
        %s2324 = sor.u32 256, 80
        %2325 = vbcast.lane.b32.xlu0 %v213, %s2324
        %v2326 = vpop.permute.xlu0 %2325
        %s2328 = sor.u32 256, 88
        %2329 = vbcast.lane.b32.xlu0 %v213, %s2328
        %v2330 = vpop.permute.xlu0 %2329
        %v2331 = vcombine.low %v2270, %v2286
        %v2332 = vcombine.high %v2270, %v2286
        %v2334 = vunpack.c.l.s4 1983009808
        %v2335 = vunpack.c.0.s8 %v2334
        %v2336 = vlaneseq
        %v2337 = vshrl.u32 %v2336, 7
        %v2338 = vsub.s32 %v2335, %v2337
        %v2339 = vrot.slane %v2331, %v2338
        %v2341 = vunpack.c.l.s4 1983009808
        %v2342 = vunpack.c.0.s8 %v2341
        %v2343 = vlaneseq
        %v2344 = vshrl.u32 %v2343, 7
        %v2345 = vsub.s32 %v2342, %v2344
        %v2346 = vrot.slane %v2332, %v2345
        %v2347 = vcombine.low %v2278, %v2294
        %v2348 = vcombine.high %v2278, %v2294
        %v2350 = vunpack.c.l.s4 1983009808
        %v2351 = vunpack.c.0.s8 %v2350
        %v2352 = vlaneseq
        %v2353 = vshrl.u32 %v2352, 7
        %v2354 = vsub.s32 %v2351, %v2353
        %v2355 = vrot.slane %v2347, %v2354
        %v2357 = vunpack.c.l.s4 1983009808
        %v2358 = vunpack.c.0.s8 %v2357
        %v2359 = vlaneseq
        %v2360 = vshrl.u32 %v2359, 7
        %v2361 = vsub.s32 %v2358, %v2360
        %v2362 = vrot.slane %v2348, %v2361
        %v2363 = vcombine.low %v2302, %v2318
        %v2364 = vcombine.high %v2302, %v2318
        %v2366 = vunpack.c.l.s4 1983009808
        %v2367 = vunpack.c.0.s8 %v2366
        %v2368 = vlaneseq
        %v2369 = vshrl.u32 %v2368, 7
        %v2370 = vsub.s32 %v2367, %v2369
        %v2371 = vrot.slane %v2363, %v2370
        %v2373 = vunpack.c.l.s4 1983009808
        %v2374 = vunpack.c.0.s8 %v2373
        %v2375 = vlaneseq
        %v2376 = vshrl.u32 %v2375, 7
        %v2377 = vsub.s32 %v2374, %v2376
        %v2378 = vrot.slane %v2364, %v2377
        %v2379 = vcombine.low %v2310, %v2326
        %v2380 = vcombine.high %v2310, %v2326
        %v2382 = vunpack.c.l.s4 1983009808
        %v2383 = vunpack.c.0.s8 %v2382
        %v2384 = vlaneseq
        %v2385 = vshrl.u32 %v2384, 7
        %v2386 = vsub.s32 %v2383, %v2385
        %v2387 = vrot.slane %v2379, %v2386
        %v2389 = vunpack.c.l.s4 1983009808
        %v2390 = vunpack.c.0.s8 %v2389
        %v2391 = vlaneseq
        %v2392 = vshrl.u32 %v2391, 7
        %v2393 = vsub.s32 %v2390, %v2392
        %v2394 = vrot.slane %v2380, %v2393
        %v2395 = vcombine.low %v2339, %v2355
        %v2396 = vcombine.high %v2339, %v2355
        %v2398 = vunpack.c.l.s4 1934713408
        %v2399 = vunpack.c.0.s8 %v2398
        %v2400 = vlaneseq
        %v2401 = vshrl.u32 %v2400, 7
        %v2402 = vsub.s32 %v2399, %v2401
        %v2403 = vrot.slane %v2395, %v2402
        %v2405 = vunpack.c.l.s4 1934713408
        %v2406 = vunpack.c.0.s8 %v2405
        %v2407 = vlaneseq
        %v2408 = vshrl.u32 %v2407, 7
        %v2409 = vsub.s32 %v2406, %v2408
        %v2410 = vrot.slane %v2396, %v2409
        %v2411 = vcombine.low %v2346, %v2362
        %v2412 = vcombine.high %v2346, %v2362
        %v2414 = vunpack.c.l.s4 1934713408
        %v2415 = vunpack.c.0.s8 %v2414
        %v2416 = vlaneseq
        %v2417 = vshrl.u32 %v2416, 7
        %v2418 = vsub.s32 %v2415, %v2417
        %v2419 = vrot.slane %v2411, %v2418
        %v2421 = vunpack.c.l.s4 1934713408
        %v2422 = vunpack.c.0.s8 %v2421
        %v2423 = vlaneseq
        %v2424 = vshrl.u32 %v2423, 7
        %v2425 = vsub.s32 %v2422, %v2424
        %v2426 = vrot.slane %v2412, %v2425
        %v2427 = vcombine.low %v2371, %v2387
        %v2428 = vcombine.high %v2371, %v2387
        %v2430 = vunpack.c.l.s4 1934713408
        %v2431 = vunpack.c.0.s8 %v2430
        %v2432 = vlaneseq
        %v2433 = vshrl.u32 %v2432, 7
        %v2434 = vsub.s32 %v2431, %v2433
        %v2435 = vrot.slane %v2427, %v2434
        %v2437 = vunpack.c.l.s4 1934713408
        %v2438 = vunpack.c.0.s8 %v2437
        %v2439 = vlaneseq
        %v2440 = vshrl.u32 %v2439, 7
        %v2441 = vsub.s32 %v2438, %v2440
        %v2442 = vrot.slane %v2428, %v2441
        %v2443 = vcombine.low %v2378, %v2394
        %v2444 = vcombine.high %v2378, %v2394
        %v2446 = vunpack.c.l.s4 1934713408
        %v2447 = vunpack.c.0.s8 %v2446
        %v2448 = vlaneseq
        %v2449 = vshrl.u32 %v2448, 7
        %v2450 = vsub.s32 %v2447, %v2449
        %v2451 = vrot.slane %v2443, %v2450
        %v2453 = vunpack.c.l.s4 1934713408
        %v2454 = vunpack.c.0.s8 %v2453
        %v2455 = vlaneseq
        %v2456 = vshrl.u32 %v2455, 7
        %v2457 = vsub.s32 %v2454, %v2456
        %v2458 = vrot.slane %v2444, %v2457
        %v2459 = vcombine.low %v2403, %v2435
        %v2460 = vcombine.high %v2403, %v2435
        %v2461 = vcombine.low %v2410, %v2442
        %v2462 = vcombine.high %v2410, %v2442
        %v2463 = vcombine.low %v2419, %v2451
        %v2464 = vcombine.high %v2419, %v2451
        %v2465 = vcombine.low %v2426, %v2458
        %v2466 = vcombine.high %v2426, %v2458
        %v2467 = vcombine.low %v2274, %v2290
        %v2468 = vcombine.high %v2274, %v2290
        %v2470 = vunpack.c.l.s4 1983009808
        %v2471 = vunpack.c.0.s8 %v2470
        %v2472 = vlaneseq
        %v2473 = vshrl.u32 %v2472, 7
        %v2474 = vsub.s32 %v2471, %v2473
        %v2475 = vrot.slane %v2467, %v2474
        %v2477 = vunpack.c.l.s4 1983009808
        %v2478 = vunpack.c.0.s8 %v2477
        %v2479 = vlaneseq
        %v2480 = vshrl.u32 %v2479, 7
        %v2481 = vsub.s32 %v2478, %v2480
        %v2482 = vrot.slane %v2468, %v2481
        %v2483 = vcombine.low %v2282, %v2298
        %v2484 = vcombine.high %v2282, %v2298
        %v2486 = vunpack.c.l.s4 1983009808
        %v2487 = vunpack.c.0.s8 %v2486
        %v2488 = vlaneseq
        %v2489 = vshrl.u32 %v2488, 7
        %v2490 = vsub.s32 %v2487, %v2489
        %v2491 = vrot.slane %v2483, %v2490
        %v2493 = vunpack.c.l.s4 1983009808
        %v2494 = vunpack.c.0.s8 %v2493
        %v2495 = vlaneseq
        %v2496 = vshrl.u32 %v2495, 7
        %v2497 = vsub.s32 %v2494, %v2496
        %v2498 = vrot.slane %v2484, %v2497
        %v2499 = vcombine.low %v2306, %v2322
        %v2500 = vcombine.high %v2306, %v2322
        %v2502 = vunpack.c.l.s4 1983009808
        %v2503 = vunpack.c.0.s8 %v2502
        %v2504 = vlaneseq
        %v2505 = vshrl.u32 %v2504, 7
        %v2506 = vsub.s32 %v2503, %v2505
        %v2507 = vrot.slane %v2499, %v2506
        %v2509 = vunpack.c.l.s4 1983009808
        %v2510 = vunpack.c.0.s8 %v2509
        %v2511 = vlaneseq
        %v2512 = vshrl.u32 %v2511, 7
        %v2513 = vsub.s32 %v2510, %v2512
        %v2514 = vrot.slane %v2500, %v2513
        %v2515 = vcombine.low %v2314, %v2330
        %v2516 = vcombine.high %v2314, %v2330
        %v2518 = vunpack.c.l.s4 1983009808
        %v2519 = vunpack.c.0.s8 %v2518
        %v2520 = vlaneseq
        %v2521 = vshrl.u32 %v2520, 7
        %v2522 = vsub.s32 %v2519, %v2521
        %v2523 = vrot.slane %v2515, %v2522
        %v2525 = vunpack.c.l.s4 1983009808
        %v2526 = vunpack.c.0.s8 %v2525
        %v2527 = vlaneseq
        %v2528 = vshrl.u32 %v2527, 7
        %v2529 = vsub.s32 %v2526, %v2528
        %v2530 = vrot.slane %v2516, %v2529
        %v2531 = vcombine.low %v2475, %v2491
        %v2532 = vcombine.high %v2475, %v2491
        %v2534 = vunpack.c.l.s4 1934713408
        %v2535 = vunpack.c.0.s8 %v2534
        %v2536 = vlaneseq
        %v2537 = vshrl.u32 %v2536, 7
        %v2538 = vsub.s32 %v2535, %v2537
        %v2539 = vrot.slane %v2531, %v2538
        %v2541 = vunpack.c.l.s4 1934713408
        %v2542 = vunpack.c.0.s8 %v2541
        %v2543 = vlaneseq
        %v2544 = vshrl.u32 %v2543, 7
        %v2545 = vsub.s32 %v2542, %v2544
        %v2546 = vrot.slane %v2532, %v2545
        %v2547 = vcombine.low %v2482, %v2498
        %v2548 = vcombine.high %v2482, %v2498
        %v2550 = vunpack.c.l.s4 1934713408
        %v2551 = vunpack.c.0.s8 %v2550
        %v2552 = vlaneseq
        %v2553 = vshrl.u32 %v2552, 7
        %v2554 = vsub.s32 %v2551, %v2553
        %v2555 = vrot.slane %v2547, %v2554
        %v2557 = vunpack.c.l.s4 1934713408
        %v2558 = vunpack.c.0.s8 %v2557
        %v2559 = vlaneseq
        %v2560 = vshrl.u32 %v2559, 7
        %v2561 = vsub.s32 %v2558, %v2560
        %v2562 = vrot.slane %v2548, %v2561
        %v2563 = vcombine.low %v2507, %v2523
        %v2564 = vcombine.high %v2507, %v2523
        %v2566 = vunpack.c.l.s4 1934713408
        %v2567 = vunpack.c.0.s8 %v2566
        %v2568 = vlaneseq
        %v2569 = vshrl.u32 %v2568, 7
        %v2570 = vsub.s32 %v2567, %v2569
        %v2571 = vrot.slane %v2563, %v2570
        %v2573 = vunpack.c.l.s4 1934713408
        %v2574 = vunpack.c.0.s8 %v2573
        %v2575 = vlaneseq
        %v2576 = vshrl.u32 %v2575, 7
        %v2577 = vsub.s32 %v2574, %v2576
        %v2578 = vrot.slane %v2564, %v2577
        %v2579 = vcombine.low %v2514, %v2530
        %v2580 = vcombine.high %v2514, %v2530
        %v2582 = vunpack.c.l.s4 1934713408
        %v2583 = vunpack.c.0.s8 %v2582
        %v2584 = vlaneseq
        %v2585 = vshrl.u32 %v2584, 7
        %v2586 = vsub.s32 %v2583, %v2585
        %v2587 = vrot.slane %v2579, %v2586
        %v2589 = vunpack.c.l.s4 1934713408
        %v2590 = vunpack.c.0.s8 %v2589
        %v2591 = vlaneseq
        %v2592 = vshrl.u32 %v2591, 7
        %v2593 = vsub.s32 %v2590, %v2592
        %v2594 = vrot.slane %v2580, %v2593
        %v2595 = vcombine.low %v2539, %v2571
        %v2596 = vcombine.high %v2539, %v2571
        %v2597 = vcombine.low %v2546, %v2578
        %v2598 = vcombine.high %v2546, %v2578
        %v2599 = vcombine.low %v2555, %v2587
        %v2600 = vcombine.high %v2555, %v2587
        %v2601 = vcombine.low %v2562, %v2594
        %v2602 = vcombine.high %v2562, %v2594
        %2604 = vrot.lane.b32.xlu0 %v2460, 2
        %v2605 = vpop.permute.xlu0 %2604
        %2608 = vrot.lane.b32.xlu0 %v2461, 4
        %v2609 = vpop.permute.xlu0 %2608
        %2612 = vrot.lane.b32.xlu0 %v2462, 6
        %v2613 = vpop.permute.xlu0 %2612
        %2616 = vrot.lane.b32.xlu0 %v2463, 8
        %v2617 = vpop.permute.xlu0 %2616
        %2620 = vrot.lane.b32.xlu0 %v2464, 10
        %v2621 = vpop.permute.xlu0 %2620
        %2624 = vrot.lane.b32.xlu0 %v2465, 12
        %v2625 = vpop.permute.xlu0 %2624
        %2628 = vrot.lane.b32.xlu0 %v2466, 14
        %v2629 = vpop.permute.xlu0 %2628
        %2632 = vrot.lane.b32.xlu0 %v2595, 16
        %v2633 = vpop.permute.xlu0 %2632
        %2636 = vrot.lane.b32.xlu0 %v2596, 18
        %v2637 = vpop.permute.xlu0 %2636
        %2640 = vrot.lane.b32.xlu0 %v2597, 20
        %v2641 = vpop.permute.xlu0 %2640
        %2644 = vrot.lane.b32.xlu0 %v2598, 22
        %v2645 = vpop.permute.xlu0 %2644
        %2648 = vrot.lane.b32.xlu0 %v2599, 24
        %v2649 = vpop.permute.xlu0 %2648
        %2652 = vrot.lane.b32.xlu0 %v2600, 26
        %v2653 = vpop.permute.xlu0 %2652
        %2656 = vrot.lane.b32.xlu0 %v2601, 28
        %v2657 = vpop.permute.xlu0 %2656
        %2660 = vrot.lane.b32.xlu0 %v2602, 30
        %v2661 = vpop.permute.xlu0 %2660
        %v2663 = vsel %vm553, %v2459, %v2605
        %v2664 = vsel %vm555, %v2663, %v2609
        %v2665 = vsel %vm557, %v2664, %v2613
        %v2666 = vsel %vm559, %v2665, %v2617
        %v2667 = vsel %vm561, %v2666, %v2621
        %v2668 = vsel %vm563, %v2667, %v2625
        %v2669 = vsel %vm565, %v2668, %v2629
        %v2670 = vsel %vm567, %v2669, %v2633
        %v2671 = vsel %vm569, %v2670, %v2637
        %v2672 = vsel %vm571, %v2671, %v2641
        %v2673 = vsel %vm573, %v2672, %v2645
        %v2674 = vsel %vm575, %v2673, %v2649
        %v2675 = vsel %vm577, %v2674, %v2653
        %v2676 = vsel %vm579, %v2675, %v2657
        %v2677 = vsel %vm581, %v2676, %v2661
        %2679 = vrot.lane.b32.xlu0 %v2677, 64
        %v2680 = vpop.permute.xlu0 %2679
        %2682 = vst.msk [vmem:[%s131 + $0x10] sm:$0xff] %vm1006, %v2680
        %2683 = vrot.lane.b32.xlu0 %v2677, 96
        %v2684 = vpop.permute.xlu0 %2683
        %2686 = vst.msk [vmem:[%s131 + $0x10] sm:$0xff] %vm1011, %v2684
        %s2688 = sor.u32 256, 96
        %2689 = vbcast.lane.b32.xlu0 %v136, %s2688
        %v2690 = vpop.permute.xlu0 %2689
        %s2692 = sor.u32 256, 104
        %2693 = vbcast.lane.b32.xlu0 %v136, %s2692
        %v2694 = vpop.permute.xlu0 %2693
        %s2696 = sor.u32 256, 96
        %2697 = vbcast.lane.b32.xlu0 %v147, %s2696
        %v2698 = vpop.permute.xlu0 %2697
        %s2700 = sor.u32 256, 104
        %2701 = vbcast.lane.b32.xlu0 %v147, %s2700
        %v2702 = vpop.permute.xlu0 %2701
        %s2704 = sor.u32 256, 96
        %2705 = vbcast.lane.b32.xlu0 %v158, %s2704
        %v2706 = vpop.permute.xlu0 %2705
        %s2708 = sor.u32 256, 104
        %2709 = vbcast.lane.b32.xlu0 %v158, %s2708
        %v2710 = vpop.permute.xlu0 %2709
        %s2712 = sor.u32 256, 96
        %2713 = vbcast.lane.b32.xlu0 %v169, %s2712
        %v2714 = vpop.permute.xlu0 %2713
        %s2716 = sor.u32 256, 104
        %2717 = vbcast.lane.b32.xlu0 %v169, %s2716
        %v2718 = vpop.permute.xlu0 %2717
        %s2720 = sor.u32 256, 96
        %2721 = vbcast.lane.b32.xlu0 %v180, %s2720
        %v2722 = vpop.permute.xlu0 %2721
        %s2724 = sor.u32 256, 104
        %2725 = vbcast.lane.b32.xlu0 %v180, %s2724
        %v2726 = vpop.permute.xlu0 %2725
        %s2728 = sor.u32 256, 96
        %2729 = vbcast.lane.b32.xlu0 %v191, %s2728
        %v2730 = vpop.permute.xlu0 %2729
        %s2732 = sor.u32 256, 104
        %2733 = vbcast.lane.b32.xlu0 %v191, %s2732
        %v2734 = vpop.permute.xlu0 %2733
        %s2736 = sor.u32 256, 96
        %2737 = vbcast.lane.b32.xlu0 %v202, %s2736
        %v2738 = vpop.permute.xlu0 %2737
        %s2740 = sor.u32 256, 104
        %2741 = vbcast.lane.b32.xlu0 %v202, %s2740
        %v2742 = vpop.permute.xlu0 %2741
        %s2744 = sor.u32 256, 96
        %2745 = vbcast.lane.b32.xlu0 %v213, %s2744
        %v2746 = vpop.permute.xlu0 %2745
        %s2748 = sor.u32 256, 104
        %2749 = vbcast.lane.b32.xlu0 %v213, %s2748
        %v2750 = vpop.permute.xlu0 %2749
        %v2751 = vcombine.low %v2690, %v2706
        %v2752 = vcombine.high %v2690, %v2706
        %v2754 = vunpack.c.l.s4 1983009808
        %v2755 = vunpack.c.0.s8 %v2754
        %v2756 = vlaneseq
        %v2757 = vshrl.u32 %v2756, 7
        %v2758 = vsub.s32 %v2755, %v2757
        %v2759 = vrot.slane %v2751, %v2758
        %v2761 = vunpack.c.l.s4 1983009808
        %v2762 = vunpack.c.0.s8 %v2761
        %v2763 = vlaneseq
        %v2764 = vshrl.u32 %v2763, 7
        %v2765 = vsub.s32 %v2762, %v2764
        %v2766 = vrot.slane %v2752, %v2765
        %v2767 = vcombine.low %v2698, %v2714
        %v2768 = vcombine.high %v2698, %v2714
        %v2770 = vunpack.c.l.s4 1983009808
        %v2771 = vunpack.c.0.s8 %v2770
        %v2772 = vlaneseq
        %v2773 = vshrl.u32 %v2772, 7
        %v2774 = vsub.s32 %v2771, %v2773
        %v2775 = vrot.slane %v2767, %v2774
        %v2777 = vunpack.c.l.s4 1983009808
        %v2778 = vunpack.c.0.s8 %v2777
        %v2779 = vlaneseq
        %v2780 = vshrl.u32 %v2779, 7
        %v2781 = vsub.s32 %v2778, %v2780
        %v2782 = vrot.slane %v2768, %v2781
        %v2783 = vcombine.low %v2722, %v2738
        %v2784 = vcombine.high %v2722, %v2738
        %v2786 = vunpack.c.l.s4 1983009808
        %v2787 = vunpack.c.0.s8 %v2786
        %v2788 = vlaneseq
        %v2789 = vshrl.u32 %v2788, 7
        %v2790 = vsub.s32 %v2787, %v2789
        %v2791 = vrot.slane %v2783, %v2790
        %v2793 = vunpack.c.l.s4 1983009808
        %v2794 = vunpack.c.0.s8 %v2793
        %v2795 = vlaneseq
        %v2796 = vshrl.u32 %v2795, 7
        %v2797 = vsub.s32 %v2794, %v2796
        %v2798 = vrot.slane %v2784, %v2797
        %v2799 = vcombine.low %v2730, %v2746
        %v2800 = vcombine.high %v2730, %v2746
        %v2802 = vunpack.c.l.s4 1983009808
        %v2803 = vunpack.c.0.s8 %v2802
        %v2804 = vlaneseq
        %v2805 = vshrl.u32 %v2804, 7
        %v2806 = vsub.s32 %v2803, %v2805
        %v2807 = vrot.slane %v2799, %v2806
        %v2809 = vunpack.c.l.s4 1983009808
        %v2810 = vunpack.c.0.s8 %v2809
        %v2811 = vlaneseq
        %v2812 = vshrl.u32 %v2811, 7
        %v2813 = vsub.s32 %v2810, %v2812
        %v2814 = vrot.slane %v2800, %v2813
        %v2815 = vcombine.low %v2759, %v2775
        %v2816 = vcombine.high %v2759, %v2775
        %v2818 = vunpack.c.l.s4 1934713408
        %v2819 = vunpack.c.0.s8 %v2818
        %v2820 = vlaneseq
        %v2821 = vshrl.u32 %v2820, 7
        %v2822 = vsub.s32 %v2819, %v2821
        %v2823 = vrot.slane %v2815, %v2822
        %v2825 = vunpack.c.l.s4 1934713408
        %v2826 = vunpack.c.0.s8 %v2825
        %v2827 = vlaneseq
        %v2828 = vshrl.u32 %v2827, 7
        %v2829 = vsub.s32 %v2826, %v2828
        %v2830 = vrot.slane %v2816, %v2829
        %v2831 = vcombine.low %v2766, %v2782
        %v2832 = vcombine.high %v2766, %v2782
        %v2834 = vunpack.c.l.s4 1934713408
        %v2835 = vunpack.c.0.s8 %v2834
        %v2836 = vlaneseq
        %v2837 = vshrl.u32 %v2836, 7
        %v2838 = vsub.s32 %v2835, %v2837
        %v2839 = vrot.slane %v2831, %v2838
        %v2841 = vunpack.c.l.s4 1934713408
        %v2842 = vunpack.c.0.s8 %v2841
        %v2843 = vlaneseq
        %v2844 = vshrl.u32 %v2843, 7
        %v2845 = vsub.s32 %v2842, %v2844
        %v2846 = vrot.slane %v2832, %v2845
        %v2847 = vcombine.low %v2791, %v2807
        %v2848 = vcombine.high %v2791, %v2807
        %v2850 = vunpack.c.l.s4 1934713408
        %v2851 = vunpack.c.0.s8 %v2850
        %v2852 = vlaneseq
        %v2853 = vshrl.u32 %v2852, 7
        %v2854 = vsub.s32 %v2851, %v2853
        %v2855 = vrot.slane %v2847, %v2854
        %v2857 = vunpack.c.l.s4 1934713408
        %v2858 = vunpack.c.0.s8 %v2857
        %v2859 = vlaneseq
        %v2860 = vshrl.u32 %v2859, 7
        %v2861 = vsub.s32 %v2858, %v2860
        %v2862 = vrot.slane %v2848, %v2861
        %v2863 = vcombine.low %v2798, %v2814
        %v2864 = vcombine.high %v2798, %v2814
        %v2866 = vunpack.c.l.s4 1934713408
        %v2867 = vunpack.c.0.s8 %v2866
        %v2868 = vlaneseq
        %v2869 = vshrl.u32 %v2868, 7
        %v2870 = vsub.s32 %v2867, %v2869
        %v2871 = vrot.slane %v2863, %v2870
        %v2873 = vunpack.c.l.s4 1934713408
        %v2874 = vunpack.c.0.s8 %v2873
        %v2875 = vlaneseq
        %v2876 = vshrl.u32 %v2875, 7
        %v2877 = vsub.s32 %v2874, %v2876
        %v2878 = vrot.slane %v2864, %v2877
        %v2879 = vcombine.low %v2823, %v2855
        %v2880 = vcombine.high %v2823, %v2855
        %v2881 = vcombine.low %v2830, %v2862
        %v2882 = vcombine.high %v2830, %v2862
        %v2883 = vcombine.low %v2839, %v2871
        %v2884 = vcombine.high %v2839, %v2871
        %v2885 = vcombine.low %v2846, %v2878
        %v2886 = vcombine.high %v2846, %v2878
        %v2887 = vcombine.low %v2694, %v2710
        %v2888 = vcombine.high %v2694, %v2710
        %v2890 = vunpack.c.l.s4 1983009808
        %v2891 = vunpack.c.0.s8 %v2890
        %v2892 = vlaneseq
        %v2893 = vshrl.u32 %v2892, 7
        %v2894 = vsub.s32 %v2891, %v2893
        %v2895 = vrot.slane %v2887, %v2894
        %v2897 = vunpack.c.l.s4 1983009808
        %v2898 = vunpack.c.0.s8 %v2897
        %v2899 = vlaneseq
        %v2900 = vshrl.u32 %v2899, 7
        %v2901 = vsub.s32 %v2898, %v2900
        %v2902 = vrot.slane %v2888, %v2901
        %v2903 = vcombine.low %v2702, %v2718
        %v2904 = vcombine.high %v2702, %v2718
        %v2906 = vunpack.c.l.s4 1983009808
        %v2907 = vunpack.c.0.s8 %v2906
        %v2908 = vlaneseq
        %v2909 = vshrl.u32 %v2908, 7
        %v2910 = vsub.s32 %v2907, %v2909
        %v2911 = vrot.slane %v2903, %v2910
        %v2913 = vunpack.c.l.s4 1983009808
        %v2914 = vunpack.c.0.s8 %v2913
        %v2915 = vlaneseq
        %v2916 = vshrl.u32 %v2915, 7
        %v2917 = vsub.s32 %v2914, %v2916
        %v2918 = vrot.slane %v2904, %v2917
        %v2919 = vcombine.low %v2726, %v2742
        %v2920 = vcombine.high %v2726, %v2742
        %v2922 = vunpack.c.l.s4 1983009808
        %v2923 = vunpack.c.0.s8 %v2922
        %v2924 = vlaneseq
        %v2925 = vshrl.u32 %v2924, 7
        %v2926 = vsub.s32 %v2923, %v2925
        %v2927 = vrot.slane %v2919, %v2926
        %v2929 = vunpack.c.l.s4 1983009808
        %v2930 = vunpack.c.0.s8 %v2929
        %v2931 = vlaneseq
        %v2932 = vshrl.u32 %v2931, 7
        %v2933 = vsub.s32 %v2930, %v2932
        %v2934 = vrot.slane %v2920, %v2933
        %v2935 = vcombine.low %v2734, %v2750
        %v2936 = vcombine.high %v2734, %v2750
        %v2938 = vunpack.c.l.s4 1983009808
        %v2939 = vunpack.c.0.s8 %v2938
        %v2940 = vlaneseq
        %v2941 = vshrl.u32 %v2940, 7
        %v2942 = vsub.s32 %v2939, %v2941
        %v2943 = vrot.slane %v2935, %v2942
        %v2945 = vunpack.c.l.s4 1983009808
        %v2946 = vunpack.c.0.s8 %v2945
        %v2947 = vlaneseq
        %v2948 = vshrl.u32 %v2947, 7
        %v2949 = vsub.s32 %v2946, %v2948
        %v2950 = vrot.slane %v2936, %v2949
        %v2951 = vcombine.low %v2895, %v2911
        %v2952 = vcombine.high %v2895, %v2911
        %v2954 = vunpack.c.l.s4 1934713408
        %v2955 = vunpack.c.0.s8 %v2954
        %v2956 = vlaneseq
        %v2957 = vshrl.u32 %v2956, 7
        %v2958 = vsub.s32 %v2955, %v2957
        %v2959 = vrot.slane %v2951, %v2958
        %v2961 = vunpack.c.l.s4 1934713408
        %v2962 = vunpack.c.0.s8 %v2961
        %v2963 = vlaneseq
        %v2964 = vshrl.u32 %v2963, 7
        %v2965 = vsub.s32 %v2962, %v2964
        %v2966 = vrot.slane %v2952, %v2965
        %v2967 = vcombine.low %v2902, %v2918
        %v2968 = vcombine.high %v2902, %v2918
        %v2970 = vunpack.c.l.s4 1934713408
        %v2971 = vunpack.c.0.s8 %v2970
        %v2972 = vlaneseq
        %v2973 = vshrl.u32 %v2972, 7
        %v2974 = vsub.s32 %v2971, %v2973
        %v2975 = vrot.slane %v2967, %v2974
        %v2977 = vunpack.c.l.s4 1934713408
        %v2978 = vunpack.c.0.s8 %v2977
        %v2979 = vlaneseq
        %v2980 = vshrl.u32 %v2979, 7
        %v2981 = vsub.s32 %v2978, %v2980
        %v2982 = vrot.slane %v2968, %v2981
        %v2983 = vcombine.low %v2927, %v2943
        %v2984 = vcombine.high %v2927, %v2943
        %v2986 = vunpack.c.l.s4 1934713408
        %v2987 = vunpack.c.0.s8 %v2986
        %v2988 = vlaneseq
        %v2989 = vshrl.u32 %v2988, 7
        %v2990 = vsub.s32 %v2987, %v2989
        %v2991 = vrot.slane %v2983, %v2990
        %v2993 = vunpack.c.l.s4 1934713408
        %v2994 = vunpack.c.0.s8 %v2993
        %v2995 = vlaneseq
        %v2996 = vshrl.u32 %v2995, 7
        %v2997 = vsub.s32 %v2994, %v2996
        %v2998 = vrot.slane %v2984, %v2997
        %v2999 = vcombine.low %v2934, %v2950
        %v3000 = vcombine.high %v2934, %v2950
        %v3002 = vunpack.c.l.s4 1934713408
        %v3003 = vunpack.c.0.s8 %v3002
        %v3004 = vlaneseq
        %v3005 = vshrl.u32 %v3004, 7
        %v3006 = vsub.s32 %v3003, %v3005
        %v3007 = vrot.slane %v2999, %v3006
        %v3009 = vunpack.c.l.s4 1934713408
        %v3010 = vunpack.c.0.s8 %v3009
        %v3011 = vlaneseq
        %v3012 = vshrl.u32 %v3011, 7
        %v3013 = vsub.s32 %v3010, %v3012
        %v3014 = vrot.slane %v3000, %v3013
        %v3015 = vcombine.low %v2959, %v2991
        %v3016 = vcombine.high %v2959, %v2991
        %v3017 = vcombine.low %v2966, %v2998
        %v3018 = vcombine.high %v2966, %v2998
        %v3019 = vcombine.low %v2975, %v3007
        %v3020 = vcombine.high %v2975, %v3007
        %v3021 = vcombine.low %v2982, %v3014
        %v3022 = vcombine.high %v2982, %v3014
        %3024 = vrot.lane.b32.xlu0 %v2880, 2
        %v3025 = vpop.permute.xlu0 %3024
        %3028 = vrot.lane.b32.xlu0 %v2881, 4
        %v3029 = vpop.permute.xlu0 %3028
        %3032 = vrot.lane.b32.xlu0 %v2882, 6
        %v3033 = vpop.permute.xlu0 %3032
        %3036 = vrot.lane.b32.xlu0 %v2883, 8
        %v3037 = vpop.permute.xlu0 %3036
        %3040 = vrot.lane.b32.xlu0 %v2884, 10
        %v3041 = vpop.permute.xlu0 %3040
        %3044 = vrot.lane.b32.xlu0 %v2885, 12
        %v3045 = vpop.permute.xlu0 %3044
        %3048 = vrot.lane.b32.xlu0 %v2886, 14
        %v3049 = vpop.permute.xlu0 %3048
        %3052 = vrot.lane.b32.xlu0 %v3015, 16
        %v3053 = vpop.permute.xlu0 %3052
        %3056 = vrot.lane.b32.xlu0 %v3016, 18
        %v3057 = vpop.permute.xlu0 %3056
        %3060 = vrot.lane.b32.xlu0 %v3017, 20
        %v3061 = vpop.permute.xlu0 %3060
        %3064 = vrot.lane.b32.xlu0 %v3018, 22
        %v3065 = vpop.permute.xlu0 %3064
        %3068 = vrot.lane.b32.xlu0 %v3019, 24
        %v3069 = vpop.permute.xlu0 %3068
        %3072 = vrot.lane.b32.xlu0 %v3020, 26
        %v3073 = vpop.permute.xlu0 %3072
        %3076 = vrot.lane.b32.xlu0 %v3021, 28
        %v3077 = vpop.permute.xlu0 %3076
        %3080 = vrot.lane.b32.xlu0 %v3022, 30
        %v3081 = vpop.permute.xlu0 %3080
        %v3083 = vsel %vm553, %v2879, %v3025
        %v3084 = vsel %vm555, %v3083, %v3029
        %v3085 = vsel %vm557, %v3084, %v3033
        %v3086 = vsel %vm559, %v3085, %v3037
        %v3087 = vsel %vm561, %v3086, %v3041
        %v3088 = vsel %vm563, %v3087, %v3045
        %v3089 = vsel %vm565, %v3088, %v3049
        %v3090 = vsel %vm567, %v3089, %v3053
        %v3091 = vsel %vm569, %v3090, %v3057
        %v3092 = vsel %vm571, %v3091, %v3061
        %v3093 = vsel %vm573, %v3092, %v3065
        %v3094 = vsel %vm575, %v3093, %v3069
        %v3095 = vsel %vm577, %v3094, %v3073
        %v3096 = vsel %vm579, %v3095, %v3077
        %v3097 = vsel %vm581, %v3096, %v3081
        %3098 = vst.msk [vmem:[%s131 + $0x18] sm:$0xff] %vm583, %v3097
        %3100 = vrot.lane.b32.xlu0 %v3097, 32
        %v3101 = vpop.permute.xlu0 %3100
        %3103 = vst.msk [vmem:[%s131 + $0x18] sm:$0xff] %vm589, %v3101
        %s3105 = sor.u32 256, 112
        %3106 = vbcast.lane.b32.xlu0 %v136, %s3105
        %v3107 = vpop.permute.xlu0 %3106
        %s3109 = sor.u32 256, 120
        %3110 = vbcast.lane.b32.xlu0 %v136, %s3109
        %v3111 = vpop.permute.xlu0 %3110
        %s3113 = sor.u32 256, 112
        %3114 = vbcast.lane.b32.xlu0 %v147, %s3113
        %v3115 = vpop.permute.xlu0 %3114
        %s3117 = sor.u32 256, 120
        %3118 = vbcast.lane.b32.xlu0 %v147, %s3117
        %v3119 = vpop.permute.xlu0 %3118
        %s3121 = sor.u32 256, 112
        %3122 = vbcast.lane.b32.xlu0 %v158, %s3121
        %v3123 = vpop.permute.xlu0 %3122
        %s3125 = sor.u32 256, 120
        %3126 = vbcast.lane.b32.xlu0 %v158, %s3125
        %v3127 = vpop.permute.xlu0 %3126
        %s3129 = sor.u32 256, 112
        %3130 = vbcast.lane.b32.xlu0 %v169, %s3129
        %v3131 = vpop.permute.xlu0 %3130
        %s3133 = sor.u32 256, 120
        %3134 = vbcast.lane.b32.xlu0 %v169, %s3133
        %v3135 = vpop.permute.xlu0 %3134
        %s3137 = sor.u32 256, 112
        %3138 = vbcast.lane.b32.xlu0 %v180, %s3137
        %v3139 = vpop.permute.xlu0 %3138
        %s3141 = sor.u32 256, 120
        %3142 = vbcast.lane.b32.xlu0 %v180, %s3141
        %v3143 = vpop.permute.xlu0 %3142
        %s3145 = sor.u32 256, 112
        %3146 = vbcast.lane.b32.xlu0 %v191, %s3145
        %v3147 = vpop.permute.xlu0 %3146
        %s3149 = sor.u32 256, 120
        %3150 = vbcast.lane.b32.xlu0 %v191, %s3149
        %v3151 = vpop.permute.xlu0 %3150
        %s3153 = sor.u32 256, 112
        %3154 = vbcast.lane.b32.xlu0 %v202, %s3153
        %v3155 = vpop.permute.xlu0 %3154
        %s3157 = sor.u32 256, 120
        %3158 = vbcast.lane.b32.xlu0 %v202, %s3157
        %v3159 = vpop.permute.xlu0 %3158
        %s3161 = sor.u32 256, 112
        %3162 = vbcast.lane.b32.xlu0 %v213, %s3161
        %v3163 = vpop.permute.xlu0 %3162
        %s3165 = sor.u32 256, 120
        %3166 = vbcast.lane.b32.xlu0 %v213, %s3165
        %v3167 = vpop.permute.xlu0 %3166
        %v3168 = vcombine.low %v3107, %v3123
        %v3169 = vcombine.high %v3107, %v3123
        %v3171 = vunpack.c.l.s4 1983009808
        %v3172 = vunpack.c.0.s8 %v3171
        %v3173 = vlaneseq
        %v3174 = vshrl.u32 %v3173, 7
        %v3175 = vsub.s32 %v3172, %v3174
        %v3176 = vrot.slane %v3168, %v3175
        %v3178 = vunpack.c.l.s4 1983009808
        %v3179 = vunpack.c.0.s8 %v3178
        %v3180 = vlaneseq
        %v3181 = vshrl.u32 %v3180, 7
        %v3182 = vsub.s32 %v3179, %v3181
        %v3183 = vrot.slane %v3169, %v3182
        %v3184 = vcombine.low %v3115, %v3131
        %v3185 = vcombine.high %v3115, %v3131
        %v3187 = vunpack.c.l.s4 1983009808
        %v3188 = vunpack.c.0.s8 %v3187
        %v3189 = vlaneseq
        %v3190 = vshrl.u32 %v3189, 7
        %v3191 = vsub.s32 %v3188, %v3190
        %v3192 = vrot.slane %v3184, %v3191
        %v3194 = vunpack.c.l.s4 1983009808
        %v3195 = vunpack.c.0.s8 %v3194
        %v3196 = vlaneseq
        %v3197 = vshrl.u32 %v3196, 7
        %v3198 = vsub.s32 %v3195, %v3197
        %v3199 = vrot.slane %v3185, %v3198
        %v3200 = vcombine.low %v3139, %v3155
        %v3201 = vcombine.high %v3139, %v3155
        %v3203 = vunpack.c.l.s4 1983009808
        %v3204 = vunpack.c.0.s8 %v3203
        %v3205 = vlaneseq
        %v3206 = vshrl.u32 %v3205, 7
        %v3207 = vsub.s32 %v3204, %v3206
        %v3208 = vrot.slane %v3200, %v3207
        %v3210 = vunpack.c.l.s4 1983009808
        %v3211 = vunpack.c.0.s8 %v3210
        %v3212 = vlaneseq
        %v3213 = vshrl.u32 %v3212, 7
        %v3214 = vsub.s32 %v3211, %v3213
        %v3215 = vrot.slane %v3201, %v3214
        %v3216 = vcombine.low %v3147, %v3163
        %v3217 = vcombine.high %v3147, %v3163
        %v3219 = vunpack.c.l.s4 1983009808
        %v3220 = vunpack.c.0.s8 %v3219
        %v3221 = vlaneseq
        %v3222 = vshrl.u32 %v3221, 7
        %v3223 = vsub.s32 %v3220, %v3222
        %v3224 = vrot.slane %v3216, %v3223
        %v3226 = vunpack.c.l.s4 1983009808
        %v3227 = vunpack.c.0.s8 %v3226
        %v3228 = vlaneseq
        %v3229 = vshrl.u32 %v3228, 7
        %v3230 = vsub.s32 %v3227, %v3229
        %v3231 = vrot.slane %v3217, %v3230
        %v3232 = vcombine.low %v3176, %v3192
        %v3233 = vcombine.high %v3176, %v3192
        %v3235 = vunpack.c.l.s4 1934713408
        %v3236 = vunpack.c.0.s8 %v3235
        %v3237 = vlaneseq
        %v3238 = vshrl.u32 %v3237, 7
        %v3239 = vsub.s32 %v3236, %v3238
        %v3240 = vrot.slane %v3232, %v3239
        %v3242 = vunpack.c.l.s4 1934713408
        %v3243 = vunpack.c.0.s8 %v3242
        %v3244 = vlaneseq
        %v3245 = vshrl.u32 %v3244, 7
        %v3246 = vsub.s32 %v3243, %v3245
        %v3247 = vrot.slane %v3233, %v3246
        %v3248 = vcombine.low %v3183, %v3199
        %v3249 = vcombine.high %v3183, %v3199
        %v3251 = vunpack.c.l.s4 1934713408
        %v3252 = vunpack.c.0.s8 %v3251
        %v3253 = vlaneseq
        %v3254 = vshrl.u32 %v3253, 7
        %v3255 = vsub.s32 %v3252, %v3254
        %v3256 = vrot.slane %v3248, %v3255
        %v3258 = vunpack.c.l.s4 1934713408
        %v3259 = vunpack.c.0.s8 %v3258
        %v3260 = vlaneseq
        %v3261 = vshrl.u32 %v3260, 7
        %v3262 = vsub.s32 %v3259, %v3261
        %v3263 = vrot.slane %v3249, %v3262
        %v3264 = vcombine.low %v3208, %v3224
        %v3265 = vcombine.high %v3208, %v3224
        %v3267 = vunpack.c.l.s4 1934713408
        %v3268 = vunpack.c.0.s8 %v3267
        %v3269 = vlaneseq
        %v3270 = vshrl.u32 %v3269, 7
        %v3271 = vsub.s32 %v3268, %v3270
        %v3272 = vrot.slane %v3264, %v3271
        %v3274 = vunpack.c.l.s4 1934713408
        %v3275 = vunpack.c.0.s8 %v3274
        %v3276 = vlaneseq
        %v3277 = vshrl.u32 %v3276, 7
        %v3278 = vsub.s32 %v3275, %v3277
        %v3279 = vrot.slane %v3265, %v3278
        %v3280 = vcombine.low %v3215, %v3231
        %v3281 = vcombine.high %v3215, %v3231
        %v3283 = vunpack.c.l.s4 1934713408
        %v3284 = vunpack.c.0.s8 %v3283
        %v3285 = vlaneseq
        %v3286 = vshrl.u32 %v3285, 7
        %v3287 = vsub.s32 %v3284, %v3286
        %v3288 = vrot.slane %v3280, %v3287
        %v3290 = vunpack.c.l.s4 1934713408
        %v3291 = vunpack.c.0.s8 %v3290
        %v3292 = vlaneseq
        %v3293 = vshrl.u32 %v3292, 7
        %v3294 = vsub.s32 %v3291, %v3293
        %v3295 = vrot.slane %v3281, %v3294
        %v3296 = vcombine.low %v3240, %v3272
        %v3297 = vcombine.high %v3240, %v3272
        %v3298 = vcombine.low %v3247, %v3279
        %v3299 = vcombine.high %v3247, %v3279
        %v3300 = vcombine.low %v3256, %v3288
        %v3301 = vcombine.high %v3256, %v3288
        %v3302 = vcombine.low %v3263, %v3295
        %v3303 = vcombine.high %v3263, %v3295
        %v3304 = vcombine.low %v3111, %v3127
        %v3305 = vcombine.high %v3111, %v3127
        %v3307 = vunpack.c.l.s4 1983009808
        %v3308 = vunpack.c.0.s8 %v3307
        %v3309 = vlaneseq
        %v3310 = vshrl.u32 %v3309, 7
        %v3311 = vsub.s32 %v3308, %v3310
        %v3312 = vrot.slane %v3304, %v3311
        %v3314 = vunpack.c.l.s4 1983009808
        %v3315 = vunpack.c.0.s8 %v3314
        %v3316 = vlaneseq
        %v3317 = vshrl.u32 %v3316, 7
        %v3318 = vsub.s32 %v3315, %v3317
        %v3319 = vrot.slane %v3305, %v3318
        %v3320 = vcombine.low %v3119, %v3135
        %v3321 = vcombine.high %v3119, %v3135
        %v3323 = vunpack.c.l.s4 1983009808
        %v3324 = vunpack.c.0.s8 %v3323
        %v3325 = vlaneseq
        %v3326 = vshrl.u32 %v3325, 7
        %v3327 = vsub.s32 %v3324, %v3326
        %v3328 = vrot.slane %v3320, %v3327
        %v3330 = vunpack.c.l.s4 1983009808
        %v3331 = vunpack.c.0.s8 %v3330
        %v3332 = vlaneseq
        %v3333 = vshrl.u32 %v3332, 7
        %v3334 = vsub.s32 %v3331, %v3333
        %v3335 = vrot.slane %v3321, %v3334
        %v3336 = vcombine.low %v3143, %v3159
        %v3337 = vcombine.high %v3143, %v3159
        %v3339 = vunpack.c.l.s4 1983009808
        %v3340 = vunpack.c.0.s8 %v3339
        %v3341 = vlaneseq
        %v3342 = vshrl.u32 %v3341, 7
        %v3343 = vsub.s32 %v3340, %v3342
        %v3344 = vrot.slane %v3336, %v3343
        %v3346 = vunpack.c.l.s4 1983009808
        %v3347 = vunpack.c.0.s8 %v3346
        %v3348 = vlaneseq
        %v3349 = vshrl.u32 %v3348, 7
        %v3350 = vsub.s32 %v3347, %v3349
        %v3351 = vrot.slane %v3337, %v3350
        %v3352 = vcombine.low %v3151, %v3167
        %v3353 = vcombine.high %v3151, %v3167
        %v3355 = vunpack.c.l.s4 1983009808
        %v3356 = vunpack.c.0.s8 %v3355
        %v3357 = vlaneseq
        %v3358 = vshrl.u32 %v3357, 7
        %v3359 = vsub.s32 %v3356, %v3358
        %v3360 = vrot.slane %v3352, %v3359
        %v3362 = vunpack.c.l.s4 1983009808
        %v3363 = vunpack.c.0.s8 %v3362
        %v3364 = vlaneseq
        %v3365 = vshrl.u32 %v3364, 7
        %v3366 = vsub.s32 %v3363, %v3365
        %v3367 = vrot.slane %v3353, %v3366
        %v3368 = vcombine.low %v3312, %v3328
        %v3369 = vcombine.high %v3312, %v3328
        %v3371 = vunpack.c.l.s4 1934713408
        %v3372 = vunpack.c.0.s8 %v3371
        %v3373 = vlaneseq
        %v3374 = vshrl.u32 %v3373, 7
        %v3375 = vsub.s32 %v3372, %v3374
        %v3376 = vrot.slane %v3368, %v3375
        %v3378 = vunpack.c.l.s4 1934713408
        %v3379 = vunpack.c.0.s8 %v3378
        %v3380 = vlaneseq
        %v3381 = vshrl.u32 %v3380, 7
        %v3382 = vsub.s32 %v3379, %v3381
        %v3383 = vrot.slane %v3369, %v3382
        %v3384 = vcombine.low %v3319, %v3335
        %v3385 = vcombine.high %v3319, %v3335
        %v3387 = vunpack.c.l.s4 1934713408
        %v3388 = vunpack.c.0.s8 %v3387
        %v3389 = vlaneseq
        %v3390 = vshrl.u32 %v3389, 7
        %v3391 = vsub.s32 %v3388, %v3390
        %v3392 = vrot.slane %v3384, %v3391
        %v3394 = vunpack.c.l.s4 1934713408
        %v3395 = vunpack.c.0.s8 %v3394
        %v3396 = vlaneseq
        %v3397 = vshrl.u32 %v3396, 7
        %v3398 = vsub.s32 %v3395, %v3397
        %v3399 = vrot.slane %v3385, %v3398
        %v3400 = vcombine.low %v3344, %v3360
        %v3401 = vcombine.high %v3344, %v3360
        %v3403 = vunpack.c.l.s4 1934713408
        %v3404 = vunpack.c.0.s8 %v3403
        %v3405 = vlaneseq
        %v3406 = vshrl.u32 %v3405, 7
        %v3407 = vsub.s32 %v3404, %v3406
        %v3408 = vrot.slane %v3400, %v3407
        %v3410 = vunpack.c.l.s4 1934713408
        %v3411 = vunpack.c.0.s8 %v3410
        %v3412 = vlaneseq
        %v3413 = vshrl.u32 %v3412, 7
        %v3414 = vsub.s32 %v3411, %v3413
        %v3415 = vrot.slane %v3401, %v3414
        %v3416 = vcombine.low %v3351, %v3367
        %v3417 = vcombine.high %v3351, %v3367
        %v3419 = vunpack.c.l.s4 1934713408
        %v3420 = vunpack.c.0.s8 %v3419
        %v3421 = vlaneseq
        %v3422 = vshrl.u32 %v3421, 7
        %v3423 = vsub.s32 %v3420, %v3422
        %v3424 = vrot.slane %v3416, %v3423
        %v3426 = vunpack.c.l.s4 1934713408
        %v3427 = vunpack.c.0.s8 %v3426
        %v3428 = vlaneseq
        %v3429 = vshrl.u32 %v3428, 7
        %v3430 = vsub.s32 %v3427, %v3429
        %v3431 = vrot.slane %v3417, %v3430
        %v3432 = vcombine.low %v3376, %v3408
        %v3433 = vcombine.high %v3376, %v3408
        %v3434 = vcombine.low %v3383, %v3415
        %v3435 = vcombine.high %v3383, %v3415
        %v3436 = vcombine.low %v3392, %v3424
        %v3437 = vcombine.high %v3392, %v3424
        %v3438 = vcombine.low %v3399, %v3431
        %v3439 = vcombine.high %v3399, %v3431
        %3441 = vrot.lane.b32.xlu0 %v3297, 2
        %v3442 = vpop.permute.xlu0 %3441
        %3445 = vrot.lane.b32.xlu0 %v3298, 4
        %v3446 = vpop.permute.xlu0 %3445
        %3449 = vrot.lane.b32.xlu0 %v3299, 6
        %v3450 = vpop.permute.xlu0 %3449
        %3453 = vrot.lane.b32.xlu0 %v3300, 8
        %v3454 = vpop.permute.xlu0 %3453
        %3457 = vrot.lane.b32.xlu0 %v3301, 10
        %v3458 = vpop.permute.xlu0 %3457
        %3461 = vrot.lane.b32.xlu0 %v3302, 12
        %v3462 = vpop.permute.xlu0 %3461
        %3465 = vrot.lane.b32.xlu0 %v3303, 14
        %v3466 = vpop.permute.xlu0 %3465
        %3469 = vrot.lane.b32.xlu0 %v3432, 16
        %v3470 = vpop.permute.xlu0 %3469
        %3473 = vrot.lane.b32.xlu0 %v3433, 18
        %v3474 = vpop.permute.xlu0 %3473
        %3477 = vrot.lane.b32.xlu0 %v3434, 20
        %v3478 = vpop.permute.xlu0 %3477
        %3481 = vrot.lane.b32.xlu0 %v3435, 22
        %v3482 = vpop.permute.xlu0 %3481
        %3485 = vrot.lane.b32.xlu0 %v3436, 24
        %v3486 = vpop.permute.xlu0 %3485
        %3489 = vrot.lane.b32.xlu0 %v3437, 26
        %v3490 = vpop.permute.xlu0 %3489
        %3493 = vrot.lane.b32.xlu0 %v3438, 28
        %v3494 = vpop.permute.xlu0 %3493
        %3497 = vrot.lane.b32.xlu0 %v3439, 30
        %v3498 = vpop.permute.xlu0 %3497
        %v3500 = vsel %vm553, %v3296, %v3442
        %v3501 = vsel %vm555, %v3500, %v3446
        %v3502 = vsel %vm557, %v3501, %v3450
        %v3503 = vsel %vm559, %v3502, %v3454
        %v3504 = vsel %vm561, %v3503, %v3458
        %v3505 = vsel %vm563, %v3504, %v3462
        %v3506 = vsel %vm565, %v3505, %v3466
        %v3507 = vsel %vm567, %v3506, %v3470
        %v3508 = vsel %vm569, %v3507, %v3474
        %v3509 = vsel %vm571, %v3508, %v3478
        %v3510 = vsel %vm573, %v3509, %v3482
        %v3511 = vsel %vm575, %v3510, %v3486
        %v3512 = vsel %vm577, %v3511, %v3490
        %v3513 = vsel %vm579, %v3512, %v3494
        %v3514 = vsel %vm581, %v3513, %v3498
        %3516 = vrot.lane.b32.xlu0 %v3514, 64
        %v3517 = vpop.permute.xlu0 %3516
        %3519 = vst.msk [vmem:[%s131 + $0x18] sm:$0xff] %vm1006, %v3517
        %3520 = vrot.lane.b32.xlu0 %v3514, 96
        %v3521 = vpop.permute.xlu0 %3520
        %3523 = vst.msk [vmem:[%s131 + $0x18] sm:$0xff] %vm1011, %v3521
        %s3524 = sand.u32 %s52, 1
        %s3525 = scalar_lea.sflag [#allocation4], %s3524
        %s3526 = sand.u32 %s52, 1
        %s3527 = smul.addr %s3526, 32
        %s3528 = scalar_lea.vmem [#allocation5], %s3527
        // Predicated region
        $region29: #{tpu_custom_call.1} parent=23 // pred_check
          %p3529 = pneg %p62
        $region30: #{tpu_custom_call.1} parent=23 // pred_check_branch
          %3531 = sbr.rel (%p3529) target = $region32
        $region31: #{tpu_custom_call.1} parent=23 // pred_region
          %s3533 = ssub.s32 512, 512
          %3534 = vsyncadd %s3525, %s3533
          %s3535 = smul.addr %s18, 4
          %s3536 = smul.addr %s3535, 128
          %s3537 = scalar_lea.hbm %s1, %s3536
          %s3539 = sshll.u32 %s3528, 4
          %s3540 = int_to_ptr.vmem [resolvable:$true] %s3539
          %3542 = dma.vmem_to_hbm [thread:$0]  %s3540, 512, %s3537, %s3525
        $region32: #{tpu_custom_call.1} parent=23 // pred_fallthru
          _
      $region24: #{tpu_custom_call.1} parent=5 // pred_fallthru
        _
      %p3543 = scmp.le.s32.totalorder 2, %s13
      // Predicated region
      $region33: #{tpu_custom_call.1} parent=5 // pred_check
        %p3544 = pneg %p3543
      $region34: #{tpu_custom_call.1} parent=5 // pred_check_branch
        %3546 = sbr.rel (%p3544) target = $region36
      $region35: #{tpu_custom_call.1} parent=5 // pred_region
        %s3547 = ssub.s32 %s13, 2
        // Predicated region
        $region37: #{tpu_custom_call.1} parent=35 // pred_check
          %p3548 = pneg %p68
        $region38: #{tpu_custom_call.1} parent=35 // pred_check_branch
          %3550 = sbr.rel (%p3548) target = $region40
        $region39: #{tpu_custom_call.1} parent=35 // pred_region
          %s3551 = sand.u32 %s53, 1
          %s3552 = scalar_lea.sflag [#allocation4], %s3551
          %s3553 = sand.u32 %s53, 1
          %s3554 = smul.addr %s3553, 32
          %s3555 = scalar_lea.vmem [#allocation5], %s3554
          %3556 = dma.done %s3552, 512
        $region40: #{tpu_custom_call.1} parent=35 // pred_fallthru
          _
      $region36: #{tpu_custom_call.1} parent=5 // pred_fallthru
        _
    $region6: #{tpu_custom_call.1} parent=1 // loop_footer
      %s17 = sadd.s32 1, %s13
    $region7: #{tpu_custom_call.1} parent=1 // loop_footer_branch
      %12 = sbr.rel target = $region3
    $region8: #{tpu_custom_call.1} parent=1 // loop_exit
      _
    %3557 = vsyncpa [#allocation3], 1
    %s3558 = scalar_lea.sflag [#allocation3], 1
    %3559 = vsyncpa %s3558, 1
    %3560 = vsyncpa [#allocation4], 1
    %s3561 = scalar_lea.sflag [#allocation4], 1
    %3562 = vsyncpa %s3561, 1

</llo_original>
